<compile_context>
chip_gen: v6e
topology: v6e:2x2x1
jax: 0.10.0
libtpu: 0.0.40
codegen_flags: <defaults>
</compile_context>

<pallas_src>
import jax
import jax.numpy as jnp
from jax.experimental import pallas as pl
from jax.experimental.pallas import tpu as pltpu

EPS = 1e-9            # self.eps in the module
SMOOTH = 1.0          # standard Dice smooth term
LOG_CLAMP = -100.0    # torch BCELoss clamps log terms at -100

# prediction order inside the kernel:
#   [output, outputs1, outputs2, outputs3, outputs4,
#    outputs1_1, outputs1_2, outputs1_3, outputs1_4]
W_BCE = (1.0, 0.4, 0.5, 0.7, 0.8, 0.4, 0.5, 0.7, 0.8)
W_DICE = (1.0, 0.4, 0.5, 0.7, 0.8, 0.4, 0.7, 0.8, 1.0)
NUM_PREDS = 9


def _make_kernel(B, P, tile_p, tiles_per_split, need_mask):
    """Partial-sum kernel: accumulates per-map BCE sums, intersections,
    prediction sums and label sums over the P-tile grid axis."""

    def kernel(label_ref, *refs):
        pred_refs = refs[:NUM_PREDS]
        bce_ref, inter_ref, psum_ref, lsum_ref = refs[NUM_PREDS:]
        t = pl.program_id(1)   # reduction axis (P tiles within this split)

        @pl.when(t == 0)
        def _init():
            bce_ref[...] = jnp.zeros_like(bce_ref)
            inter_ref[...] = jnp.zeros_like(inter_ref)
            psum_ref[...] = jnp.zeros_like(psum_ref)
            lsum_ref[...] = jnp.zeros_like(lsum_ref)

        # label preprocessing hoisted out of the 9-map loop
        label = jnp.clip(label_ref[...].astype(jnp.float32), EPS, 1.0 - EPS)

        if need_mask:
            s = pl.program_id(0)
            g = s * tiles_per_split + t
            col = g * tile_p + jax.lax.broadcasted_iota(
                jnp.int32, (B, tile_p), 1)
            valid = col < P
            label_m = jnp.where(valid, label, 0.0)
        else:
            valid = None
            label_m = label

        one_minus_label = 1.0 - label
        lsum_ref[0] += jnp.sum(label_m, axis=1, keepdims=True)       # (B, 1)

        for k in range(NUM_PREDS):                                   # unrolled
            x = pred_refs[k][...].astype(jnp.float32)
            # shared exp: sigmoid and log(sigmoid) reuse the same exp
            e = jnp.exp(-x)
            denom = 1.0 + e
            p = 1.0 / denom
            log_p = jnp.maximum(-jnp.log(denom), LOG_CLAMP)
            # keep torch's f32 saturation semantics for log(1 - sigmoid(x))
            log_1mp = jnp.maximum(jnp.log(1.0 - p), LOG_CLAMP)

            bce_elem = label * log_p + one_minus_label * log_1mp
            prod = p * label
            if need_mask:
                bce_elem = jnp.where(valid, bce_elem, 0.0)
                prod = jnp.where(valid, prod, 0.0)
                psrc = jnp.where(valid, p, 0.0)
            else:
                psrc = p

            bce_ref[0, k] += jnp.sum(bce_elem, axis=(0, 1), keepdims=True)
            inter_ref[0, k] += jnp.sum(prod, axis=1, keepdims=True)
            psum_ref[0, k] += jnp.sum(psrc, axis=1, keepdims=True)

    return kernel


def ps_multi_loss(inputs, target, *, tile_p=2048, nsplit=2):
    """inputs = (outputs1, outputs2, outputs3, outputs4,
                 outputs1_1, outputs1_2, outputs1_3, outputs1_4, output),
       each NCHW logits; target is NCHW (same shape)."""
    (o1, o2, o3, o4, o11, o12, o13, o14, out) = inputs
    B = target.shape[0]
    P = 1
    for d in target.shape[1:]:
        P *= d

    # Kernel order: output first, then the 8 side outputs (matches W_BCE/W_DICE).
    preds = [out, o1, o2, o3, o4, o11, o12, o13, o14]
    preds2d = [x.reshape(B, P) for x in preds]      # free reshape, no dtype copy
    label2d = target.reshape(B, P)

    # ---- tiling over P ----
    tile_p = max(128, (tile_p // 128) * 128)        # multiple of 128
    tile_p_eff = P if P <= tile_p else tile_p
    num_tiles = (P + tile_p_eff - 1) // tile_p_eff
    ns = max(1, min(nsplit, num_tiles))
    while num_tiles % ns != 0:                      # split must divide tile count
        ns -= 1
    tps = num_tiles // ns
    need_mask = (P % tile_p_eff) != 0

    idx = lambda s, t: (0, s * tps + t)
    tile_spec = pl.BlockSpec((B, tile_p_eff), idx)
    in_specs = [tile_spec] * (NUM_PREDS + 1)

    out_shape = (
        jax.ShapeDtypeStruct((ns, NUM_PREDS, 1, 1), jnp.float32),   # BCE sums
        jax.ShapeDtypeStruct((ns, NUM_PREDS, B, 1), jnp.float32),   # sum(p*l)
        jax.ShapeDtypeStruct((ns, NUM_PREDS, B, 1), jnp.float32),   # sum(p)
        jax.ShapeDtypeStruct((ns, B, 1), jnp.float32),              # sum(l)
    )
    out_specs = (
        pl.BlockSpec((1, NUM_PREDS, 1, 1), lambda s, t: (s, 0, 0, 0)),
        pl.BlockSpec((1, NUM_PREDS, B, 1), lambda s, t: (s, 0, 0, 0)),
        pl.BlockSpec((1, NUM_PREDS, B, 1), lambda s, t: (s, 0, 0, 0)),
        pl.BlockSpec((1, B, 1), lambda s, t: (s, 0, 0)),
    )

    # explicit VMEM budget: 10 double-buffered (B, tile_p) f32 tiles + headroom
    in_bytes_per_step = (NUM_PREDS + 1) * B * tile_p_eff * 4 * 2
    vmem_limit = int(min(48 * 1024 * 1024,
                         max(16 * 1024 * 1024, 4 * in_bytes_per_step)))

    kernel = _make_kernel(B, P, tile_p_eff, tps, need_mask)
    bce_p, inter_p, psum_p, lsum_p = pl.pallas_call(
        kernel,
        grid=(ns, tps),
        in_specs=in_specs,
        out_specs=out_specs,
        out_shape=out_shape,
        compiler_params=pltpu.CompilerParams(
            dimension_semantics=("parallel", "arbitrary"),
            vmem_limit_bytes=vmem_limit,
        ),
    )(label2d, *preds2d)

    # ---- tiny JAX epilogue: combine split partials, finalize BCE/Dice, weight ----
    bce_sum = jnp.sum(bce_p, axis=(0, 2, 3))            # (9,)
    inter = jnp.sum(inter_p, axis=(0, 3))               # (9, B)
    psum = jnp.sum(psum_p, axis=(0, 3))                 # (9, B)
    lsum = jnp.sum(lsum_p, axis=(0, 2))                 # (B,)

    w_bce = jnp.asarray(W_BCE, jnp.float32)
    w_dice = jnp.asarray(W_DICE, jnp.float32)
    bce = -bce_sum * (1.0 / float(B * P))                        # (9,)
    dice = 2.0 * (inter + SMOOTH) / (psum + lsum[None, :] + SMOOTH)
    dice_loss = 1.0 - jnp.mean(dice, axis=1)                     # (9,)
    return jnp.sum(w_bce * bce + w_dice * dice_loss)


def _reference_loss(inputs, target):
    """Pure-JAX reference mirroring the PyTorch forward."""
    (o1, o2, o3, o4, o11, o12, o13, o14, out) = inputs
    B = target.shape[0]
    label = jnp.clip(target.reshape(B, -1).astype(jnp.float32), EPS, 1.0 - EPS)
    preds = [out, o1, o2, o3, o4, o11, o12, o13, o14]
    total = 0.0
    for k, lg in enumerate(preds):
        p = jax.nn.sigmoid(lg.reshape(B, -1).astype(jnp.float32))
        log_p = jnp.maximum(jnp.log(p), LOG_CLAMP)
        log_1mp = jnp.maximum(jnp.log(1.0 - p), LOG_CLAMP)
        bce = -jnp.mean(label * log_p + (1.0 - label) * log_1mp)
        inter = jnp.sum(p * label, axis=1)
        dice = 2.0 * (inter + SMOOTH) / (jnp.sum(p, 1) + jnp.sum(label, 1) + SMOOTH)
        dice_loss = 1.0 - jnp.mean(dice)
        total = total + W_BCE[k] * bce + W_DICE[k] * dice_loss
    return total


if __name__ == "__main__":
    key = jax.random.PRNGKey(0)
    B, C, H, W = 2, 4, 16, 16   # small NCHW segmentation maps

    keys = jax.random.split(key, 10)
    logits = [jax.random.normal(keys[i], (B, C, H, W), dtype=jnp.float32) * 2.0
              for i in range(9)]
    # (outputs1, outputs2, outputs3, outputs4, o1_1, o1_2, o1_3, o1_4, output)
    inputs = tuple(logits)
    target = (jax.random.uniform(keys[9], (B, C, H, W)) > 0.5).astype(jnp.float32)

    # small tile_p so the toy shape still exercises the (split, P-tile) grid
    loss_fn = jax.jit(lambda ins, tgt: ps_multi_loss(ins, tgt, tile_p=256, nsplit=2))
    loss = jax.block_until_ready(loss_fn(inputs, target))
    ref = jax.block_until_ready(_reference_loss(inputs, target))

    assert jnp.isfinite(loss), "kernel returned non-finite loss"
    assert jnp.allclose(loss, ref, rtol=1e-5, atol=1e-5), (loss, ref)
    print("KERNEL_OK")
</pallas_src>

<mosaic_0001>
module attributes {stable_mosaic.version = 11 : i64} {
  func.func @kernel(%arg0: i32, %arg1: i32, %arg2: memref<2x256xf32, #tpu.memory_space<vmem>>, %arg3: memref<2x256xf32, #tpu.memory_space<vmem>>, %arg4: memref<2x256xf32, #tpu.memory_space<vmem>>, %arg5: memref<2x256xf32, #tpu.memory_space<vmem>>, %arg6: memref<2x256xf32, #tpu.memory_space<vmem>>, %arg7: memref<2x256xf32, #tpu.memory_space<vmem>>, %arg8: memref<2x256xf32, #tpu.memory_space<vmem>>, %arg9: memref<2x256xf32, #tpu.memory_space<vmem>>, %arg10: memref<2x256xf32, #tpu.memory_space<vmem>>, %arg11: memref<2x256xf32, #tpu.memory_space<vmem>>, %arg12: memref<1x9x1x1xf32, #tpu.memory_space<vmem>>, %arg13: memref<1x9x2x1xf32, #tpu.memory_space<vmem>>, %arg14: memref<1x9x2x1xf32, #tpu.memory_space<vmem>>, %arg15: memref<1x2x1xf32, #tpu.memory_space<vmem>>) attributes {dimension_semantics = [#tpu.dimension_semantics<parallel>, #tpu.dimension_semantics<arbitrary>], iteration_bounds = array<i64: 2, 2>, scalar_prefetch = 0 : i64, scratch_operands = 0 : i64, tpu.core_type = #tpu.core_type<tc>, window_params = [{transform_indices = @transform_0, window_bounds = array<i64: 2, 256>}, {transform_indices = @transform_1, window_bounds = array<i64: 2, 256>}, {transform_indices = @transform_2, window_bounds = array<i64: 2, 256>}, {transform_indices = @transform_3, window_bounds = array<i64: 2, 256>}, {transform_indices = @transform_4, window_bounds = array<i64: 2, 256>}, {transform_indices = @transform_5, window_bounds = array<i64: 2, 256>}, {transform_indices = @transform_6, window_bounds = array<i64: 2, 256>}, {transform_indices = @transform_7, window_bounds = array<i64: 2, 256>}, {transform_indices = @transform_8, window_bounds = array<i64: 2, 256>}, {transform_indices = @transform_9, window_bounds = array<i64: 2, 256>}, {transform_indices = @transform_10, window_bounds = array<i64: 1, 9, 1, 1>}, {transform_indices = @transform_11, window_bounds = array<i64: 1, 9, 2, 1>}, {transform_indices = @transform_12, window_bounds = array<i64: 1, 9, 2, 1>}, {transform_indices = @transform_13, window_bounds = array<i64: 1, 2, 1>}]} {
    %c0_i32 = arith.constant 0 : i32
    %0 = arith.cmpi eq, %arg1, %c0_i32 : i32
    %1 = arith.extui %0 : i1 to i32
    %c0_i32_0 = arith.constant 0 : i32
    %2 = arith.cmpi ne, %1, %c0_i32_0 : i32
    scf.if %2 {
      %cst_327 = arith.constant 0.000000e+00 : f32
      %459 = vector.broadcast %cst_327 : f32 to vector<1x9x1x1xf32>
      %c0_328 = arith.constant 0 : index
      %c0_329 = arith.constant 0 : index
      %c0_330 = arith.constant 0 : index
      %c0_331 = arith.constant 0 : index
      %460 = vector.load %arg12[%c0_328, %c0_329, %c0_330, %c0_331] : memref<1x9x1x1xf32, #tpu.memory_space<vmem>>, vector<1x9x1x1xf32>
      tpu.vector_store %arg12[%c0_328, %c0_329, %c0_330, %c0_331], %459 {strides = array<i32>} : memref<1x9x1x1xf32, #tpu.memory_space<vmem>>, vector<1x9x1x1xf32>,
      %cst_332 = arith.constant 0.000000e+00 : f32
      %461 = vector.broadcast %cst_332 : f32 to vector<1x9x2x1xf32>
      %c0_333 = arith.constant 0 : index
      %c0_334 = arith.constant 0 : index
      %c0_335 = arith.constant 0 : index
      %c0_336 = arith.constant 0 : index
      %462 = vector.load %arg13[%c0_333, %c0_334, %c0_335, %c0_336] : memref<1x9x2x1xf32, #tpu.memory_space<vmem>>, vector<1x9x2x1xf32>
      tpu.vector_store %arg13[%c0_333, %c0_334, %c0_335, %c0_336], %461 {strides = array<i32>} : memref<1x9x2x1xf32, #tpu.memory_space<vmem>>, vector<1x9x2x1xf32>,
      %cst_337 = arith.constant 0.000000e+00 : f32
      %463 = vector.broadcast %cst_337 : f32 to vector<1x9x2x1xf32>
      %c0_338 = arith.constant 0 : index
      %c0_339 = arith.constant 0 : index
      %c0_340 = arith.constant 0 : index
      %c0_341 = arith.constant 0 : index
      %464 = vector.load %arg14[%c0_338, %c0_339, %c0_340, %c0_341] : memref<1x9x2x1xf32, #tpu.memory_space<vmem>>, vector<1x9x2x1xf32>
      tpu.vector_store %arg14[%c0_338, %c0_339, %c0_340, %c0_341], %463 {strides = array<i32>} : memref<1x9x2x1xf32, #tpu.memory_space<vmem>>, vector<1x9x2x1xf32>,
      %cst_342 = arith.constant 0.000000e+00 : f32
      %465 = vector.broadcast %cst_342 : f32 to vector<1x2x1xf32>
      %c0_343 = arith.constant 0 : index
      %c0_344 = arith.constant 0 : index
      %c0_345 = arith.constant 0 : index
      %466 = vector.load %arg15[%c0_343, %c0_344, %c0_345] : memref<1x2x1xf32, #tpu.memory_space<vmem>>, vector<1x2x1xf32>
      tpu.vector_store %arg15[%c0_343, %c0_344, %c0_345], %465 {strides = array<i32>} : memref<1x2x1xf32, #tpu.memory_space<vmem>>, vector<1x2x1xf32>,
    } else {
    }
    %c0 = arith.constant 0 : index
    %c0_1 = arith.constant 0 : index
    %3 = vector.load %arg2[%c0, %c0_1] : memref<2x256xf32, #tpu.memory_space<vmem>>, vector<2x256xf32>
    %cst = arith.constant 9.99999971E-10 : f32
    %cst_2 = arith.constant 1.000000e+00 : f32
    %4 = vector.broadcast %cst : f32 to vector<2x256xf32>
    %5 = arith.maximumf %4, %3 : vector<2x256xf32>
    %6 = vector.broadcast %cst_2 : f32 to vector<2x256xf32>
    %7 = arith.minimumf %6, %5 : vector<2x256xf32>
    %cst_3 = arith.constant 1.000000e+00 : f32
    %8 = vector.broadcast %cst_3 : f32 to vector<2x256xf32>
    %9 = arith.subf %8, %7 : vector<2x256xf32>
    %c0_4 = arith.constant 0 : index
    %c0_5 = arith.constant 0 : index
    %c0_6 = arith.constant 0 : index
    %10 = vector.load %arg15[%c0_4, %c0_5, %c0_6] : memref<1x2x1xf32, #tpu.memory_space<vmem>>, vector<1x2x1xf32>
    %11 = vector.shape_cast %10 : vector<1x2x1xf32> to vector<2x1xf32>
    %cst_7 = arith.constant dense<0.000000e+00> : vector<2xf32>
    %12 = vector.multi_reduction <add>, %7, %cst_7 [1] : vector<2x256xf32> to vector<2xf32>
    %13 = vector.shape_cast %12 : vector<2xf32> to vector<2x1xf32>
    %14 = arith.addf %11, %13 : vector<2x1xf32>
    %c0_8 = arith.constant 0 : index
    %c0_9 = arith.constant 0 : index
    %c0_10 = arith.constant 0 : index
    %15 = vector.load %arg15[%c0_8, %c0_9, %c0_10] : memref<1x2x1xf32, #tpu.memory_space<vmem>>, vector<1x2x1xf32>
    %16 = vector.shape_cast %15 : vector<1x2x1xf32> to vector<2x1xf32>
    %17 = vector.shape_cast %14 : vector<2x1xf32> to vector<1x2x1xf32>
    tpu.vector_store %arg15[%c0_8, %c0_9, %c0_10], %17 {strides = array<i32>} : memref<1x2x1xf32, #tpu.memory_space<vmem>>, vector<1x2x1xf32>,
    %c0_11 = arith.constant 0 : index
    %c0_12 = arith.constant 0 : index
    %18 = vector.load %arg3[%c0_11, %c0_12] : memref<2x256xf32, #tpu.memory_space<vmem>>, vector<2x256xf32>
    %cst_13 = arith.constant 0.000000e+00 : f32
    %19 = vector.broadcast %cst_13 : f32 to vector<2x256xf32>
    %20 = arith.subf %19, %18 : vector<2x256xf32>
    %21 = math.exp %20 : vector<2x256xf32>
    %cst_14 = arith.constant 1.000000e+00 : f32
    %22 = vector.broadcast %cst_14 : f32 to vector<2x256xf32>
    %23 = arith.addf %22, %21 : vector<2x256xf32>
    %cst_15 = arith.constant 1.000000e+00 : f32
    %24 = vector.broadcast %cst_15 : f32 to vector<2x256xf32>
    %25 = arith.divf %24, %23 : vector<2x256xf32>
    %26 = math.log %23 : vector<2x256xf32>
    %cst_16 = arith.constant 0.000000e+00 : f32
    %27 = vector.broadcast %cst_16 : f32 to vector<2x256xf32>
    %28 = arith.subf %27, %26 : vector<2x256xf32>
    %cst_17 = arith.constant -1.000000e+02 : f32
    %29 = vector.broadcast %cst_17 : f32 to vector<2x256xf32>
    %30 = arith.maximumf %28, %29 : vector<2x256xf32>
    %cst_18 = arith.constant 1.000000e+00 : f32
    %31 = vector.broadcast %cst_18 : f32 to vector<2x256xf32>
    %32 = arith.subf %31, %25 : vector<2x256xf32>
    %33 = math.log %32 : vector<2x256xf32>
    %cst_19 = arith.constant -1.000000e+02 : f32
    %34 = vector.broadcast %cst_19 : f32 to vector<2x256xf32>
    %35 = arith.maximumf %33, %34 : vector<2x256xf32>
    %36 = arith.mulf %7, %30 : vector<2x256xf32>
    %37 = arith.mulf %9, %35 : vector<2x256xf32>
    %38 = arith.addf %36, %37 : vector<2x256xf32>
    %39 = arith.mulf %25, %7 : vector<2x256xf32>
    %c0_20 = arith.constant 0 : index
    %c0_21 = arith.constant 0 : index
    %c0_22 = arith.constant 0 : index
    %c0_23 = arith.constant 0 : index
    %40 = vector.load %arg12[%c0_20, %c0_21, %c0_22, %c0_23] : memref<1x9x1x1xf32, #tpu.memory_space<vmem>>, vector<1x1x1x1xf32>
    %41 = vector.shape_cast %40 : vector<1x1x1x1xf32> to vector<1x1xf32>
    %42 = vector.shape_cast %38 : vector<2x256xf32> to vector<1x2x256xf32>
    %cst_24 = arith.constant dense<0.000000e+00> : vector<1xf32>
    %43 = vector.multi_reduction <add>, %42, %cst_24 [1, 2] : vector<1x2x256xf32> to vector<1xf32>
    %44 = vector.shape_cast %43 : vector<1xf32> to vector<1x1x1xf32>
    %45 = vector.extract %44[0, 0, 0] : f32 from vector<1x1x1xf32>
    %46 = vector.broadcast %45 : f32 to vector<1x1xf32>
    %47 = arith.addf %41, %46 : vector<1x1xf32>
    %c0_25 = arith.constant 0 : index
    %c0_26 = arith.constant 0 : index
    %c0_27 = arith.constant 0 : index
    %c0_28 = arith.constant 0 : index
    %48 = vector.load %arg12[%c0_25, %c0_26, %c0_27, %c0_28] : memref<1x9x1x1xf32, #tpu.memory_space<vmem>>, vector<1x1x1x1xf32>
    %49 = vector.shape_cast %48 : vector<1x1x1x1xf32> to vector<1x1xf32>
    %50 = vector.shape_cast %47 : vector<1x1xf32> to vector<1x1x1x1xf32>
    tpu.vector_store %arg12[%c0_25, %c0_26, %c0_27, %c0_28], %50 {strides = array<i32>} : memref<1x9x1x1xf32, #tpu.memory_space<vmem>>, vector<1x1x1x1xf32>,
    %c0_29 = arith.constant 0 : index
    %c0_30 = arith.constant 0 : index
    %c0_31 = arith.constant 0 : index
    %c0_32 = arith.constant 0 : index
    %51 = vector.load %arg13[%c0_29, %c0_30, %c0_31, %c0_32] : memref<1x9x2x1xf32, #tpu.memory_space<vmem>>, vector<1x1x2x1xf32>
    %52 = vector.shape_cast %51 : vector<1x1x2x1xf32> to vector<2x1xf32>
    %cst_33 = arith.constant dense<0.000000e+00> : vector<2xf32>
    %53 = vector.multi_reduction <add>, %39, %cst_33 [1] : vector<2x256xf32> to vector<2xf32>
    %54 = vector.shape_cast %53 : vector<2xf32> to vector<2x1xf32>
    %55 = arith.addf %52, %54 : vector<2x1xf32>
    %c0_34 = arith.constant 0 : index
    %c0_35 = arith.constant 0 : index
    %c0_36 = arith.constant 0 : index
    %c0_37 = arith.constant 0 : index
    %56 = vector.load %arg13[%c0_34, %c0_35, %c0_36, %c0_37] : memref<1x9x2x1xf32, #tpu.memory_space<vmem>>, vector<1x1x2x1xf32>
    %57 = vector.shape_cast %56 : vector<1x1x2x1xf32> to vector<2x1xf32>
    %58 = vector.shape_cast %55 : vector<2x1xf32> to vector<1x1x2x1xf32>
    tpu.vector_store %arg13[%c0_34, %c0_35, %c0_36, %c0_37], %58 {strides = array<i32>} : memref<1x9x2x1xf32, #tpu.memory_space<vmem>>, vector<1x1x2x1xf32>,
    %c0_38 = arith.constant 0 : index
    %c0_39 = arith.constant 0 : index
    %c0_40 = arith.constant 0 : index
    %c0_41 = arith.constant 0 : index
    %59 = vector.load %arg14[%c0_38, %c0_39, %c0_40, %c0_41] : memref<1x9x2x1xf32, #tpu.memory_space<vmem>>, vector<1x1x2x1xf32>
    %60 = vector.shape_cast %59 : vector<1x1x2x1xf32> to vector<2x1xf32>
    %cst_42 = arith.constant dense<0.000000e+00> : vector<2xf32>
    %61 = vector.multi_reduction <add>, %25, %cst_42 [1] : vector<2x256xf32> to vector<2xf32>
    %62 = vector.shape_cast %61 : vector<2xf32> to vector<2x1xf32>
    %63 = arith.addf %60, %62 : vector<2x1xf32>
    %c0_43 = arith.constant 0 : index
    %c0_44 = arith.constant 0 : index
    %c0_45 = arith.constant 0 : index
    %c0_46 = arith.constant 0 : index
    %64 = vector.load %arg14[%c0_43, %c0_44, %c0_45, %c0_46] : memref<1x9x2x1xf32, #tpu.memory_space<vmem>>, vector<1x1x2x1xf32>
    %65 = vector.shape_cast %64 : vector<1x1x2x1xf32> to vector<2x1xf32>
    %66 = vector.shape_cast %63 : vector<2x1xf32> to vector<1x1x2x1xf32>
    tpu.vector_store %arg14[%c0_43, %c0_44, %c0_45, %c0_46], %66 {strides = array<i32>} : memref<1x9x2x1xf32, #tpu.memory_space<vmem>>, vector<1x1x2x1xf32>,
    %c0_47 = arith.constant 0 : index
    %c0_48 = arith.constant 0 : index
    %67 = vector.load %arg4[%c0_47, %c0_48] : memref<2x256xf32, #tpu.memory_space<vmem>>, vector<2x256xf32>
    %cst_49 = arith.constant 0.000000e+00 : f32
    %68 = vector.broadcast %cst_49 : f32 to vector<2x256xf32>
    %69 = arith.subf %68, %67 : vector<2x256xf32>
    %70 = math.exp %69 : vector<2x256xf32>
    %cst_50 = arith.constant 1.000000e+00 : f32
    %71 = vector.broadcast %cst_50 : f32 to vector<2x256xf32>
    %72 = arith.addf %71, %70 : vector<2x256xf32>
    %cst_51 = arith.constant 1.000000e+00 : f32
    %73 = vector.broadcast %cst_51 : f32 to vector<2x256xf32>
    %74 = arith.divf %73, %72 : vector<2x256xf32>
    %75 = math.log %72 : vector<2x256xf32>
    %cst_52 = arith.constant 0.000000e+00 : f32
    %76 = vector.broadcast %cst_52 : f32 to vector<2x256xf32>
    %77 = arith.subf %76, %75 : vector<2x256xf32>
    %cst_53 = arith.constant -1.000000e+02 : f32
    %78 = vector.broadcast %cst_53 : f32 to vector<2x256xf32>
    %79 = arith.maximumf %77, %78 : vector<2x256xf32>
    %cst_54 = arith.constant 1.000000e+00 : f32
    %80 = vector.broadcast %cst_54 : f32 to vector<2x256xf32>
    %81 = arith.subf %80, %74 : vector<2x256xf32>
    %82 = math.log %81 : vector<2x256xf32>
    %cst_55 = arith.constant -1.000000e+02 : f32
    %83 = vector.broadcast %cst_55 : f32 to vector<2x256xf32>
    %84 = arith.maximumf %82, %83 : vector<2x256xf32>
    %85 = arith.mulf %7, %79 : vector<2x256xf32>
    %86 = arith.mulf %9, %84 : vector<2x256xf32>
    %87 = arith.addf %85, %86 : vector<2x256xf32>
    %88 = arith.mulf %74, %7 : vector<2x256xf32>
    %c0_56 = arith.constant 0 : index
    %c1 = arith.constant 1 : index
    %c0_57 = arith.constant 0 : index
    %c0_58 = arith.constant 0 : index
    %89 = vector.load %arg12[%c0_56, %c1, %c0_57, %c0_58] : memref<1x9x1x1xf32, #tpu.memory_space<vmem>>, vector<1x1x1x1xf32>
    %90 = vector.shape_cast %89 : vector<1x1x1x1xf32> to vector<1x1xf32>
    %91 = vector.shape_cast %87 : vector<2x256xf32> to vector<1x2x256xf32>
    %cst_59 = arith.constant dense<0.000000e+00> : vector<1xf32>
    %92 = vector.multi_reduction <add>, %91, %cst_59 [1, 2] : vector<1x2x256xf32> to vector<1xf32>
    %93 = vector.shape_cast %92 : vector<1xf32> to vector<1x1x1xf32>
    %94 = vector.extract %93[0, 0, 0] : f32 from vector<1x1x1xf32>
    %95 = vector.broadcast %94 : f32 to vector<1x1xf32>
    %96 = arith.addf %90, %95 : vector<1x1xf32>
    %c0_60 = arith.constant 0 : index
    %c1_61 = arith.constant 1 : index
    %c0_62 = arith.constant 0 : index
    %c0_63 = arith.constant 0 : index
    %97 = vector.load %arg12[%c0_60, %c1_61, %c0_62, %c0_63] : memref<1x9x1x1xf32, #tpu.memory_space<vmem>>, vector<1x1x1x1xf32>
    %98 = vector.shape_cast %97 : vector<1x1x1x1xf32> to vector<1x1xf32>
    %99 = vector.shape_cast %96 : vector<1x1xf32> to vector<1x1x1x1xf32>
    tpu.vector_store %arg12[%c0_60, %c1_61, %c0_62, %c0_63], %99 {strides = array<i32>} : memref<1x9x1x1xf32, #tpu.memory_space<vmem>>, vector<1x1x1x1xf32>,
    %c0_64 = arith.constant 0 : index
    %c1_65 = arith.constant 1 : index
    %c0_66 = arith.constant 0 : index
    %c0_67 = arith.constant 0 : index
    %100 = vector.load %arg13[%c0_64, %c1_65, %c0_66, %c0_67] : memref<1x9x2x1xf32, #tpu.memory_space<vmem>>, vector<1x1x2x1xf32>
    %101 = vector.shape_cast %100 : vector<1x1x2x1xf32> to vector<2x1xf32>
    %cst_68 = arith.constant dense<0.000000e+00> : vector<2xf32>
    %102 = vector.multi_reduction <add>, %88, %cst_68 [1] : vector<2x256xf32> to vector<2xf32>
    %103 = vector.shape_cast %102 : vector<2xf32> to vector<2x1xf32>
    %104 = arith.addf %101, %103 : vector<2x1xf32>
    %c0_69 = arith.constant 0 : index
    %c1_70 = arith.constant 1 : index
    %c0_71 = arith.constant 0 : index
    %c0_72 = arith.constant 0 : index
    %105 = vector.load %arg13[%c0_69, %c1_70, %c0_71, %c0_72] : memref<1x9x2x1xf32, #tpu.memory_space<vmem>>, vector<1x1x2x1xf32>
    %106 = vector.shape_cast %105 : vector<1x1x2x1xf32> to vector<2x1xf32>
    %107 = vector.shape_cast %104 : vector<2x1xf32> to vector<1x1x2x1xf32>
    tpu.vector_store %arg13[%c0_69, %c1_70, %c0_71, %c0_72], %107 {strides = array<i32>} : memref<1x9x2x1xf32, #tpu.memory_space<vmem>>, vector<1x1x2x1xf32>,
    %c0_73 = arith.constant 0 : index
    %c1_74 = arith.constant 1 : index
    %c0_75 = arith.constant 0 : index
    %c0_76 = arith.constant 0 : index
    %108 = vector.load %arg14[%c0_73, %c1_74, %c0_75, %c0_76] : memref<1x9x2x1xf32, #tpu.memory_space<vmem>>, vector<1x1x2x1xf32>
    %109 = vector.shape_cast %108 : vector<1x1x2x1xf32> to vector<2x1xf32>
    %cst_77 = arith.constant dense<0.000000e+00> : vector<2xf32>
    %110 = vector.multi_reduction <add>, %74, %cst_77 [1] : vector<2x256xf32> to vector<2xf32>
    %111 = vector.shape_cast %110 : vector<2xf32> to vector<2x1xf32>
    %112 = arith.addf %109, %111 : vector<2x1xf32>
    %c0_78 = arith.constant 0 : index
    %c1_79 = arith.constant 1 : index
    %c0_80 = arith.constant 0 : index
    %c0_81 = arith.constant 0 : index
    %113 = vector.load %arg14[%c0_78, %c1_79, %c0_80, %c0_81] : memref<1x9x2x1xf32, #tpu.memory_space<vmem>>, vector<1x1x2x1xf32>
    %114 = vector.shape_cast %113 : vector<1x1x2x1xf32> to vector<2x1xf32>
    %115 = vector.shape_cast %112 : vector<2x1xf32> to vector<1x1x2x1xf32>
    tpu.vector_store %arg14[%c0_78, %c1_79, %c0_80, %c0_81], %115 {strides = array<i32>} : memref<1x9x2x1xf32, #tpu.memory_space<vmem>>, vector<1x1x2x1xf32>,
    %c0_82 = arith.constant 0 : index
    %c0_83 = arith.constant 0 : index
    %116 = vector.load %arg5[%c0_82, %c0_83] : memref<2x256xf32, #tpu.memory_space<vmem>>, vector<2x256xf32>
    %cst_84 = arith.constant 0.000000e+00 : f32
    %117 = vector.broadcast %cst_84 : f32 to vector<2x256xf32>
    %118 = arith.subf %117, %116 : vector<2x256xf32>
    %119 = math.exp %118 : vector<2x256xf32>
    %cst_85 = arith.constant 1.000000e+00 : f32
    %120 = vector.broadcast %cst_85 : f32 to vector<2x256xf32>
    %121 = arith.addf %120, %119 : vector<2x256xf32>
    %cst_86 = arith.constant 1.000000e+00 : f32
    %122 = vector.broadcast %cst_86 : f32 to vector<2x256xf32>
    %123 = arith.divf %122, %121 : vector<2x256xf32>
    %124 = math.log %121 : vector<2x256xf32>
    %cst_87 = arith.constant 0.000000e+00 : f32
    %125 = vector.broadcast %cst_87 : f32 to vector<2x256xf32>
    %126 = arith.subf %125, %124 : vector<2x256xf32>
    %cst_88 = arith.constant -1.000000e+02 : f32
    %127 = vector.broadcast %cst_88 : f32 to vector<2x256xf32>
    %128 = arith.maximumf %126, %127 : vector<2x256xf32>
    %cst_89 = arith.constant 1.000000e+00 : f32
    %129 = vector.broadcast %cst_89 : f32 to vector<2x256xf32>
    %130 = arith.subf %129, %123 : vector<2x256xf32>
    %131 = math.log %130 : vector<2x256xf32>
    %cst_90 = arith.constant -1.000000e+02 : f32
    %132 = vector.broadcast %cst_90 : f32 to vector<2x256xf32>
    %133 = arith.maximumf %131, %132 : vector<2x256xf32>
    %134 = arith.mulf %7, %128 : vector<2x256xf32>
    %135 = arith.mulf %9, %133 : vector<2x256xf32>
    %136 = arith.addf %134, %135 : vector<2x256xf32>
    %137 = arith.mulf %123, %7 : vector<2x256xf32>
    %c0_91 = arith.constant 0 : index
    %c2 = arith.constant 2 : index
    %c0_92 = arith.constant 0 : index
    %c0_93 = arith.constant 0 : index
    %138 = vector.load %arg12[%c0_91, %c2, %c0_92, %c0_93] : memref<1x9x1x1xf32, #tpu.memory_space<vmem>>, vector<1x1x1x1xf32>
    %139 = vector.shape_cast %138 : vector<1x1x1x1xf32> to vector<1x1xf32>
    %140 = vector.shape_cast %136 : vector<2x256xf32> to vector<1x2x256xf32>
    %cst_94 = arith.constant dense<0.000000e+00> : vector<1xf32>
    %141 = vector.multi_reduction <add>, %140, %cst_94 [1, 2] : vector<1x2x256xf32> to vector<1xf32>
    %142 = vector.shape_cast %141 : vector<1xf32> to vector<1x1x1xf32>
    %143 = vector.extract %142[0, 0, 0] : f32 from vector<1x1x1xf32>
    %144 = vector.broadcast %143 : f32 to vector<1x1xf32>
    %145 = arith.addf %139, %144 : vector<1x1xf32>
    %c0_95 = arith.constant 0 : index
    %c2_96 = arith.constant 2 : index
    %c0_97 = arith.constant 0 : index
    %c0_98 = arith.constant 0 : index
    %146 = vector.load %arg12[%c0_95, %c2_96, %c0_97, %c0_98] : memref<1x9x1x1xf32, #tpu.memory_space<vmem>>, vector<1x1x1x1xf32>
    %147 = vector.shape_cast %146 : vector<1x1x1x1xf32> to vector<1x1xf32>
    %148 = vector.shape_cast %145 : vector<1x1xf32> to vector<1x1x1x1xf32>
    tpu.vector_store %arg12[%c0_95, %c2_96, %c0_97, %c0_98], %148 {strides = array<i32>} : memref<1x9x1x1xf32, #tpu.memory_space<vmem>>, vector<1x1x1x1xf32>,
    %c0_99 = arith.constant 0 : index
    %c2_100 = arith.constant 2 : index
    %c0_101 = arith.constant 0 : index
    %c0_102 = arith.constant 0 : index
    %149 = vector.load %arg13[%c0_99, %c2_100, %c0_101, %c0_102] : memref<1x9x2x1xf32, #tpu.memory_space<vmem>>, vector<1x1x2x1xf32>
    %150 = vector.shape_cast %149 : vector<1x1x2x1xf32> to vector<2x1xf32>
    %cst_103 = arith.constant dense<0.000000e+00> : vector<2xf32>
    %151 = vector.multi_reduction <add>, %137, %cst_103 [1] : vector<2x256xf32> to vector<2xf32>
    %152 = vector.shape_cast %151 : vector<2xf32> to vector<2x1xf32>
    %153 = arith.addf %150, %152 : vector<2x1xf32>
    %c0_104 = arith.constant 0 : index
    %c2_105 = arith.constant 2 : index
    %c0_106 = arith.constant 0 : index
    %c0_107 = arith.constant 0 : index
    %154 = vector.load %arg13[%c0_104, %c2_105, %c0_106, %c0_107] : memref<1x9x2x1xf32, #tpu.memory_space<vmem>>, vector<1x1x2x1xf32>
    %155 = vector.shape_cast %154 : vector<1x1x2x1xf32> to vector<2x1xf32>
    %156 = vector.shape_cast %153 : vector<2x1xf32> to vector<1x1x2x1xf32>
    tpu.vector_store %arg13[%c0_104, %c2_105, %c0_106, %c0_107], %156 {strides = array<i32>} : memref<1x9x2x1xf32, #tpu.memory_space<vmem>>, vector<1x1x2x1xf32>,
    %c0_108 = arith.constant 0 : index
    %c2_109 = arith.constant 2 : index
    %c0_110 = arith.constant 0 : index
    %c0_111 = arith.constant 0 : index
    %157 = vector.load %arg14[%c0_108, %c2_109, %c0_110, %c0_111] : memref<1x9x2x1xf32, #tpu.memory_space<vmem>>, vector<1x1x2x1xf32>
    %158 = vector.shape_cast %157 : vector<1x1x2x1xf32> to vector<2x1xf32>
    %cst_112 = arith.constant dense<0.000000e+00> : vector<2xf32>
    %159 = vector.multi_reduction <add>, %123, %cst_112 [1] : vector<2x256xf32> to vector<2xf32>
    %160 = vector.shape_cast %159 : vector<2xf32> to vector<2x1xf32>
    %161 = arith.addf %158, %160 : vector<2x1xf32>
    %c0_113 = arith.constant 0 : index
    %c2_114 = arith.constant 2 : index
    %c0_115 = arith.constant 0 : index
    %c0_116 = arith.constant 0 : index
    %162 = vector.load %arg14[%c0_113, %c2_114, %c0_115, %c0_116] : memref<1x9x2x1xf32, #tpu.memory_space<vmem>>, vector<1x1x2x1xf32>
    %163 = vector.shape_cast %162 : vector<1x1x2x1xf32> to vector<2x1xf32>
    %164 = vector.shape_cast %161 : vector<2x1xf32> to vector<1x1x2x1xf32>
    tpu.vector_store %arg14[%c0_113, %c2_114, %c0_115, %c0_116], %164 {strides = array<i32>} : memref<1x9x2x1xf32, #tpu.memory_space<vmem>>, vector<1x1x2x1xf32>,
    %c0_117 = arith.constant 0 : index
    %c0_118 = arith.constant 0 : index
    %165 = vector.load %arg6[%c0_117, %c0_118] : memref<2x256xf32, #tpu.memory_space<vmem>>, vector<2x256xf32>
    %cst_119 = arith.constant 0.000000e+00 : f32
    %166 = vector.broadcast %cst_119 : f32 to vector<2x256xf32>
    %167 = arith.subf %166, %165 : vector<2x256xf32>
    %168 = math.exp %167 : vector<2x256xf32>
    %cst_120 = arith.constant 1.000000e+00 : f32
    %169 = vector.broadcast %cst_120 : f32 to vector<2x256xf32>
    %170 = arith.addf %169, %168 : vector<2x256xf32>
    %cst_121 = arith.constant 1.000000e+00 : f32
    %171 = vector.broadcast %cst_121 : f32 to vector<2x256xf32>
    %172 = arith.divf %171, %170 : vector<2x256xf32>
    %173 = math.log %170 : vector<2x256xf32>
    %cst_122 = arith.constant 0.000000e+00 : f32
    %174 = vector.broadcast %cst_122 : f32 to vector<2x256xf32>
    %175 = arith.subf %174, %173 : vector<2x256xf32>
    %cst_123 = arith.constant -1.000000e+02 : f32
    %176 = vector.broadcast %cst_123 : f32 to vector<2x256xf32>
    %177 = arith.maximumf %175, %176 : vector<2x256xf32>
    %cst_124 = arith.constant 1.000000e+00 : f32
    %178 = vector.broadcast %cst_124 : f32 to vector<2x256xf32>
    %179 = arith.subf %178, %172 : vector<2x256xf32>
    %180 = math.log %179 : vector<2x256xf32>
    %cst_125 = arith.constant -1.000000e+02 : f32
    %181 = vector.broadcast %cst_125 : f32 to vector<2x256xf32>
    %182 = arith.maximumf %180, %181 : vector<2x256xf32>
    %183 = arith.mulf %7, %177 : vector<2x256xf32>
    %184 = arith.mulf %9, %182 : vector<2x256xf32>
    %185 = arith.addf %183, %184 : vector<2x256xf32>
    %186 = arith.mulf %172, %7 : vector<2x256xf32>
    %c0_126 = arith.constant 0 : index
    %c3 = arith.constant 3 : index
    %c0_127 = arith.constant 0 : index
    %c0_128 = arith.constant 0 : index
    %187 = vector.load %arg12[%c0_126, %c3, %c0_127, %c0_128] : memref<1x9x1x1xf32, #tpu.memory_space<vmem>>, vector<1x1x1x1xf32>
    %188 = vector.shape_cast %187 : vector<1x1x1x1xf32> to vector<1x1xf32>
    %189 = vector.shape_cast %185 : vector<2x256xf32> to vector<1x2x256xf32>
    %cst_129 = arith.constant dense<0.000000e+00> : vector<1xf32>
    %190 = vector.multi_reduction <add>, %189, %cst_129 [1, 2] : vector<1x2x256xf32> to vector<1xf32>
    %191 = vector.shape_cast %190 : vector<1xf32> to vector<1x1x1xf32>
    %192 = vector.extract %191[0, 0, 0] : f32 from vector<1x1x1xf32>
    %193 = vector.broadcast %192 : f32 to vector<1x1xf32>
    %194 = arith.addf %188, %193 : vector<1x1xf32>
    %c0_130 = arith.constant 0 : index
    %c3_131 = arith.constant 3 : index
    %c0_132 = arith.constant 0 : index
    %c0_133 = arith.constant 0 : index
    %195 = vector.load %arg12[%c0_130, %c3_131, %c0_132, %c0_133] : memref<1x9x1x1xf32, #tpu.memory_space<vmem>>, vector<1x1x1x1xf32>
    %196 = vector.shape_cast %195 : vector<1x1x1x1xf32> to vector<1x1xf32>
    %197 = vector.shape_cast %194 : vector<1x1xf32> to vector<1x1x1x1xf32>
    tpu.vector_store %arg12[%c0_130, %c3_131, %c0_132, %c0_133], %197 {strides = array<i32>} : memref<1x9x1x1xf32, #tpu.memory_space<vmem>>, vector<1x1x1x1xf32>,
    %c0_134 = arith.constant 0 : index
    %c3_135 = arith.constant 3 : index
    %c0_136 = arith.constant 0 : index
    %c0_137 = arith.constant 0 : index
    %198 = vector.load %arg13[%c0_134, %c3_135, %c0_136, %c0_137] : memref<1x9x2x1xf32, #tpu.memory_space<vmem>>, vector<1x1x2x1xf32>
    %199 = vector.shape_cast %198 : vector<1x1x2x1xf32> to vector<2x1xf32>
    %cst_138 = arith.constant dense<0.000000e+00> : vector<2xf32>
    %200 = vector.multi_reduction <add>, %186, %cst_138 [1] : vector<2x256xf32> to vector<2xf32>
    %201 = vector.shape_cast %200 : vector<2xf32> to vector<2x1xf32>
    %202 = arith.addf %199, %201 : vector<2x1xf32>
    %c0_139 = arith.constant 0 : index
    %c3_140 = arith.constant 3 : index
    %c0_141 = arith.constant 0 : index
    %c0_142 = arith.constant 0 : index
    %203 = vector.load %arg13[%c0_139, %c3_140, %c0_141, %c0_142] : memref<1x9x2x1xf32, #tpu.memory_space<vmem>>, vector<1x1x2x1xf32>
    %204 = vector.shape_cast %203 : vector<1x1x2x1xf32> to vector<2x1xf32>
    %205 = vector.shape_cast %202 : vector<2x1xf32> to vector<1x1x2x1xf32>
    tpu.vector_store %arg13[%c0_139, %c3_140, %c0_141, %c0_142], %205 {strides = array<i32>} : memref<1x9x2x1xf32, #tpu.memory_space<vmem>>, vector<1x1x2x1xf32>,
    %c0_143 = arith.constant 0 : index
    %c3_144 = arith.constant 3 : index
    %c0_145 = arith.constant 0 : index
    %c0_146 = arith.constant 0 : index
    %206 = vector.load %arg14[%c0_143, %c3_144, %c0_145, %c0_146] : memref<1x9x2x1xf32, #tpu.memory_space<vmem>>, vector<1x1x2x1xf32>
    %207 = vector.shape_cast %206 : vector<1x1x2x1xf32> to vector<2x1xf32>
    %cst_147 = arith.constant dense<0.000000e+00> : vector<2xf32>
    %208 = vector.multi_reduction <add>, %172, %cst_147 [1] : vector<2x256xf32> to vector<2xf32>
    %209 = vector.shape_cast %208 : vector<2xf32> to vector<2x1xf32>
    %210 = arith.addf %207, %209 : vector<2x1xf32>
    %c0_148 = arith.constant 0 : index
    %c3_149 = arith.constant 3 : index
    %c0_150 = arith.constant 0 : index
    %c0_151 = arith.constant 0 : index
    %211 = vector.load %arg14[%c0_148, %c3_149, %c0_150, %c0_151] : memref<1x9x2x1xf32, #tpu.memory_space<vmem>>, vector<1x1x2x1xf32>
    %212 = vector.shape_cast %211 : vector<1x1x2x1xf32> to vector<2x1xf32>
    %213 = vector.shape_cast %210 : vector<2x1xf32> to vector<1x1x2x1xf32>
    tpu.vector_store %arg14[%c0_148, %c3_149, %c0_150, %c0_151], %213 {strides = array<i32>} : memref<1x9x2x1xf32, #tpu.memory_space<vmem>>, vector<1x1x2x1xf32>,
    %c0_152 = arith.constant 0 : index
    %c0_153 = arith.constant 0 : index
    %214 = vector.load %arg7[%c0_152, %c0_153] : memref<2x256xf32, #tpu.memory_space<vmem>>, vector<2x256xf32>
    %cst_154 = arith.constant 0.000000e+00 : f32
    %215 = vector.broadcast %cst_154 : f32 to vector<2x256xf32>
    %216 = arith.subf %215, %214 : vector<2x256xf32>
    %217 = math.exp %216 : vector<2x256xf32>
    %cst_155 = arith.constant 1.000000e+00 : f32
    %218 = vector.broadcast %cst_155 : f32 to vector<2x256xf32>
    %219 = arith.addf %218, %217 : vector<2x256xf32>
    %cst_156 = arith.constant 1.000000e+00 : f32
    %220 = vector.broadcast %cst_156 : f32 to vector<2x256xf32>
    %221 = arith.divf %220, %219 : vector<2x256xf32>
    %222 = math.log %219 : vector<2x256xf32>
    %cst_157 = arith.constant 0.000000e+00 : f32
    %223 = vector.broadcast %cst_157 : f32 to vector<2x256xf32>
    %224 = arith.subf %223, %222 : vector<2x256xf32>
    %cst_158 = arith.constant -1.000000e+02 : f32
    %225 = vector.broadcast %cst_158 : f32 to vector<2x256xf32>
    %226 = arith.maximumf %224, %225 : vector<2x256xf32>
    %cst_159 = arith.constant 1.000000e+00 : f32
    %227 = vector.broadcast %cst_159 : f32 to vector<2x256xf32>
    %228 = arith.subf %227, %221 : vector<2x256xf32>
    %229 = math.log %228 : vector<2x256xf32>
    %cst_160 = arith.constant -1.000000e+02 : f32
    %230 = vector.broadcast %cst_160 : f32 to vector<2x256xf32>
    %231 = arith.maximumf %229, %230 : vector<2x256xf32>
    %232 = arith.mulf %7, %226 : vector<2x256xf32>
    %233 = arith.mulf %9, %231 : vector<2x256xf32>
    %234 = arith.addf %232, %233 : vector<2x256xf32>
    %235 = arith.mulf %221, %7 : vector<2x256xf32>
    %c0_161 = arith.constant 0 : index
    %c4 = arith.constant 4 : index
    %c0_162 = arith.constant 0 : index
    %c0_163 = arith.constant 0 : index
    %236 = vector.load %arg12[%c0_161, %c4, %c0_162, %c0_163] : memref<1x9x1x1xf32, #tpu.memory_space<vmem>>, vector<1x1x1x1xf32>
    %237 = vector.shape_cast %236 : vector<1x1x1x1xf32> to vector<1x1xf32>
    %238 = vector.shape_cast %234 : vector<2x256xf32> to vector<1x2x256xf32>
    %cst_164 = arith.constant dense<0.000000e+00> : vector<1xf32>
    %239 = vector.multi_reduction <add>, %238, %cst_164 [1, 2] : vector<1x2x256xf32> to vector<1xf32>
    %240 = vector.shape_cast %239 : vector<1xf32> to vector<1x1x1xf32>
    %241 = vector.extract %240[0, 0, 0] : f32 from vector<1x1x1xf32>
    %242 = vector.broadcast %241 : f32 to vector<1x1xf32>
    %243 = arith.addf %237, %242 : vector<1x1xf32>
    %c0_165 = arith.constant 0 : index
    %c4_166 = arith.constant 4 : index
    %c0_167 = arith.constant 0 : index
    %c0_168 = arith.constant 0 : index
    %244 = vector.load %arg12[%c0_165, %c4_166, %c0_167, %c0_168] : memref<1x9x1x1xf32, #tpu.memory_space<vmem>>, vector<1x1x1x1xf32>
    %245 = vector.shape_cast %244 : vector<1x1x1x1xf32> to vector<1x1xf32>
    %246 = vector.shape_cast %243 : vector<1x1xf32> to vector<1x1x1x1xf32>
    tpu.vector_store %arg12[%c0_165, %c4_166, %c0_167, %c0_168], %246 {strides = array<i32>} : memref<1x9x1x1xf32, #tpu.memory_space<vmem>>, vector<1x1x1x1xf32>,
    %c0_169 = arith.constant 0 : index
    %c4_170 = arith.constant 4 : index
    %c0_171 = arith.constant 0 : index
    %c0_172 = arith.constant 0 : index
    %247 = vector.load %arg13[%c0_169, %c4_170, %c0_171, %c0_172] : memref<1x9x2x1xf32, #tpu.memory_space<vmem>>, vector<1x1x2x1xf32>
    %248 = vector.shape_cast %247 : vector<1x1x2x1xf32> to vector<2x1xf32>
    %cst_173 = arith.constant dense<0.000000e+00> : vector<2xf32>
    %249 = vector.multi_reduction <add>, %235, %cst_173 [1] : vector<2x256xf32> to vector<2xf32>
    %250 = vector.shape_cast %249 : vector<2xf32> to vector<2x1xf32>
    %251 = arith.addf %248, %250 : vector<2x1xf32>
    %c0_174 = arith.constant 0 : index
    %c4_175 = arith.constant 4 : index
    %c0_176 = arith.constant 0 : index
    %c0_177 = arith.constant 0 : index
    %252 = vector.load %arg13[%c0_174, %c4_175, %c0_176, %c0_177] : memref<1x9x2x1xf32, #tpu.memory_space<vmem>>, vector<1x1x2x1xf32>
    %253 = vector.shape_cast %252 : vector<1x1x2x1xf32> to vector<2x1xf32>
    %254 = vector.shape_cast %251 : vector<2x1xf32> to vector<1x1x2x1xf32>
    tpu.vector_store %arg13[%c0_174, %c4_175, %c0_176, %c0_177], %254 {strides = array<i32>} : memref<1x9x2x1xf32, #tpu.memory_space<vmem>>, vector<1x1x2x1xf32>,
    %c0_178 = arith.constant 0 : index
    %c4_179 = arith.constant 4 : index
    %c0_180 = arith.constant 0 : index
    %c0_181 = arith.constant 0 : index
    %255 = vector.load %arg14[%c0_178, %c4_179, %c0_180, %c0_181] : memref<1x9x2x1xf32, #tpu.memory_space<vmem>>, vector<1x1x2x1xf32>
    %256 = vector.shape_cast %255 : vector<1x1x2x1xf32> to vector<2x1xf32>
    %cst_182 = arith.constant dense<0.000000e+00> : vector<2xf32>
    %257 = vector.multi_reduction <add>, %221, %cst_182 [1] : vector<2x256xf32> to vector<2xf32>
    %258 = vector.shape_cast %257 : vector<2xf32> to vector<2x1xf32>
    %259 = arith.addf %256, %258 : vector<2x1xf32>
    %c0_183 = arith.constant 0 : index
    %c4_184 = arith.constant 4 : index
    %c0_185 = arith.constant 0 : index
    %c0_186 = arith.constant 0 : index
    %260 = vector.load %arg14[%c0_183, %c4_184, %c0_185, %c0_186] : memref<1x9x2x1xf32, #tpu.memory_space<vmem>>, vector<1x1x2x1xf32>
    %261 = vector.shape_cast %260 : vector<1x1x2x1xf32> to vector<2x1xf32>
    %262 = vector.shape_cast %259 : vector<2x1xf32> to vector<1x1x2x1xf32>
    tpu.vector_store %arg14[%c0_183, %c4_184, %c0_185, %c0_186], %262 {strides = array<i32>} : memref<1x9x2x1xf32, #tpu.memory_space<vmem>>, vector<1x1x2x1xf32>,
    %c0_187 = arith.constant 0 : index
    %c0_188 = arith.constant 0 : index
    %263 = vector.load %arg8[%c0_187, %c0_188] : memref<2x256xf32, #tpu.memory_space<vmem>>, vector<2x256xf32>
    %cst_189 = arith.constant 0.000000e+00 : f32
    %264 = vector.broadcast %cst_189 : f32 to vector<2x256xf32>
    %265 = arith.subf %264, %263 : vector<2x256xf32>
    %266 = math.exp %265 : vector<2x256xf32>
    %cst_190 = arith.constant 1.000000e+00 : f32
    %267 = vector.broadcast %cst_190 : f32 to vector<2x256xf32>
    %268 = arith.addf %267, %266 : vector<2x256xf32>
    %cst_191 = arith.constant 1.000000e+00 : f32
    %269 = vector.broadcast %cst_191 : f32 to vector<2x256xf32>
    %270 = arith.divf %269, %268 : vector<2x256xf32>
    %271 = math.log %268 : vector<2x256xf32>
    %cst_192 = arith.constant 0.000000e+00 : f32
    %272 = vector.broadcast %cst_192 : f32 to vector<2x256xf32>
    %273 = arith.subf %272, %271 : vector<2x256xf32>
    %cst_193 = arith.constant -1.000000e+02 : f32
    %274 = vector.broadcast %cst_193 : f32 to vector<2x256xf32>
    %275 = arith.maximumf %273, %274 : vector<2x256xf32>
    %cst_194 = arith.constant 1.000000e+00 : f32
    %276 = vector.broadcast %cst_194 : f32 to vector<2x256xf32>
    %277 = arith.subf %276, %270 : vector<2x256xf32>
    %278 = math.log %277 : vector<2x256xf32>
    %cst_195 = arith.constant -1.000000e+02 : f32
    %279 = vector.broadcast %cst_195 : f32 to vector<2x256xf32>
    %280 = arith.maximumf %278, %279 : vector<2x256xf32>
    %281 = arith.mulf %7, %275 : vector<2x256xf32>
    %282 = arith.mulf %9, %280 : vector<2x256xf32>
    %283 = arith.addf %281, %282 : vector<2x256xf32>
    %284 = arith.mulf %270, %7 : vector<2x256xf32>
    %c0_196 = arith.constant 0 : index
    %c5 = arith.constant 5 : index
    %c0_197 = arith.constant 0 : index
    %c0_198 = arith.constant 0 : index
    %285 = vector.load %arg12[%c0_196, %c5, %c0_197, %c0_198] : memref<1x9x1x1xf32, #tpu.memory_space<vmem>>, vector<1x1x1x1xf32>
    %286 = vector.shape_cast %285 : vector<1x1x1x1xf32> to vector<1x1xf32>
    %287 = vector.shape_cast %283 : vector<2x256xf32> to vector<1x2x256xf32>
    %cst_199 = arith.constant dense<0.000000e+00> : vector<1xf32>
    %288 = vector.multi_reduction <add>, %287, %cst_199 [1, 2] : vector<1x2x256xf32> to vector<1xf32>
    %289 = vector.shape_cast %288 : vector<1xf32> to vector<1x1x1xf32>
    %290 = vector.extract %289[0, 0, 0] : f32 from vector<1x1x1xf32>
    %291 = vector.broadcast %290 : f32 to vector<1x1xf32>
    %292 = arith.addf %286, %291 : vector<1x1xf32>
    %c0_200 = arith.constant 0 : index
    %c5_201 = arith.constant 5 : index
    %c0_202 = arith.constant 0 : index
    %c0_203 = arith.constant 0 : index
    %293 = vector.load %arg12[%c0_200, %c5_201, %c0_202, %c0_203] : memref<1x9x1x1xf32, #tpu.memory_space<vmem>>, vector<1x1x1x1xf32>
    %294 = vector.shape_cast %293 : vector<1x1x1x1xf32> to vector<1x1xf32>
    %295 = vector.shape_cast %292 : vector<1x1xf32> to vector<1x1x1x1xf32>
    tpu.vector_store %arg12[%c0_200, %c5_201, %c0_202, %c0_203], %295 {strides = array<i32>} : memref<1x9x1x1xf32, #tpu.memory_space<vmem>>, vector<1x1x1x1xf32>,
    %c0_204 = arith.constant 0 : index
    %c5_205 = arith.constant 5 : index
    %c0_206 = arith.constant 0 : index
    %c0_207 = arith.constant 0 : index
    %296 = vector.load %arg13[%c0_204, %c5_205, %c0_206, %c0_207] : memref<1x9x2x1xf32, #tpu.memory_space<vmem>>, vector<1x1x2x1xf32>
    %297 = vector.shape_cast %296 : vector<1x1x2x1xf32> to vector<2x1xf32>
    %cst_208 = arith.constant dense<0.000000e+00> : vector<2xf32>
    %298 = vector.multi_reduction <add>, %284, %cst_208 [1] : vector<2x256xf32> to vector<2xf32>
    %299 = vector.shape_cast %298 : vector<2xf32> to vector<2x1xf32>
    %300 = arith.addf %297, %299 : vector<2x1xf32>
    %c0_209 = arith.constant 0 : index
    %c5_210 = arith.constant 5 : index
    %c0_211 = arith.constant 0 : index
    %c0_212 = arith.constant 0 : index
    %301 = vector.load %arg13[%c0_209, %c5_210, %c0_211, %c0_212] : memref<1x9x2x1xf32, #tpu.memory_space<vmem>>, vector<1x1x2x1xf32>
    %302 = vector.shape_cast %301 : vector<1x1x2x1xf32> to vector<2x1xf32>
    %303 = vector.shape_cast %300 : vector<2x1xf32> to vector<1x1x2x1xf32>
    tpu.vector_store %arg13[%c0_209, %c5_210, %c0_211, %c0_212], %303 {strides = array<i32>} : memref<1x9x2x1xf32, #tpu.memory_space<vmem>>, vector<1x1x2x1xf32>,
    %c0_213 = arith.constant 0 : index
    %c5_214 = arith.constant 5 : index
    %c0_215 = arith.constant 0 : index
    %c0_216 = arith.constant 0 : index
    %304 = vector.load %arg14[%c0_213, %c5_214, %c0_215, %c0_216] : memref<1x9x2x1xf32, #tpu.memory_space<vmem>>, vector<1x1x2x1xf32>
    %305 = vector.shape_cast %304 : vector<1x1x2x1xf32> to vector<2x1xf32>
    %cst_217 = arith.constant dense<0.000000e+00> : vector<2xf32>
    %306 = vector.multi_reduction <add>, %270, %cst_217 [1] : vector<2x256xf32> to vector<2xf32>
    %307 = vector.shape_cast %306 : vector<2xf32> to vector<2x1xf32>
    %308 = arith.addf %305, %307 : vector<2x1xf32>
    %c0_218 = arith.constant 0 : index
    %c5_219 = arith.constant 5 : index
    %c0_220 = arith.constant 0 : index
    %c0_221 = arith.constant 0 : index
    %309 = vector.load %arg14[%c0_218, %c5_219, %c0_220, %c0_221] : memref<1x9x2x1xf32, #tpu.memory_space<vmem>>, vector<1x1x2x1xf32>
    %310 = vector.shape_cast %309 : vector<1x1x2x1xf32> to vector<2x1xf32>
    %311 = vector.shape_cast %308 : vector<2x1xf32> to vector<1x1x2x1xf32>
    tpu.vector_store %arg14[%c0_218, %c5_219, %c0_220, %c0_221], %311 {strides = array<i32>} : memref<1x9x2x1xf32, #tpu.memory_space<vmem>>, vector<1x1x2x1xf32>,
    %c0_222 = arith.constant 0 : index
    %c0_223 = arith.constant 0 : index
    %312 = vector.load %arg9[%c0_222, %c0_223] : memref<2x256xf32, #tpu.memory_space<vmem>>, vector<2x256xf32>
    %cst_224 = arith.constant 0.000000e+00 : f32
    %313 = vector.broadcast %cst_224 : f32 to vector<2x256xf32>
    %314 = arith.subf %313, %312 : vector<2x256xf32>
    %315 = math.exp %314 : vector<2x256xf32>
    %cst_225 = arith.constant 1.000000e+00 : f32
    %316 = vector.broadcast %cst_225 : f32 to vector<2x256xf32>
    %317 = arith.addf %316, %315 : vector<2x256xf32>
    %cst_226 = arith.constant 1.000000e+00 : f32
    %318 = vector.broadcast %cst_226 : f32 to vector<2x256xf32>
    %319 = arith.divf %318, %317 : vector<2x256xf32>
    %320 = math.log %317 : vector<2x256xf32>
    %cst_227 = arith.constant 0.000000e+00 : f32
    %321 = vector.broadcast %cst_227 : f32 to vector<2x256xf32>
    %322 = arith.subf %321, %320 : vector<2x256xf32>
    %cst_228 = arith.constant -1.000000e+02 : f32
    %323 = vector.broadcast %cst_228 : f32 to vector<2x256xf32>
    %324 = arith.maximumf %322, %323 : vector<2x256xf32>
    %cst_229 = arith.constant 1.000000e+00 : f32
    %325 = vector.broadcast %cst_229 : f32 to vector<2x256xf32>
    %326 = arith.subf %325, %319 : vector<2x256xf32>
    %327 = math.log %326 : vector<2x256xf32>
    %cst_230 = arith.constant -1.000000e+02 : f32
    %328 = vector.broadcast %cst_230 : f32 to vector<2x256xf32>
    %329 = arith.maximumf %327, %328 : vector<2x256xf32>
    %330 = arith.mulf %7, %324 : vector<2x256xf32>
    %331 = arith.mulf %9, %329 : vector<2x256xf32>
    %332 = arith.addf %330, %331 : vector<2x256xf32>
    %333 = arith.mulf %319, %7 : vector<2x256xf32>
    %c0_231 = arith.constant 0 : index
    %c6 = arith.constant 6 : index
    %c0_232 = arith.constant 0 : index
    %c0_233 = arith.constant 0 : index
    %334 = vector.load %arg12[%c0_231, %c6, %c0_232, %c0_233] : memref<1x9x1x1xf32, #tpu.memory_space<vmem>>, vector<1x1x1x1xf32>
    %335 = vector.shape_cast %334 : vector<1x1x1x1xf32> to vector<1x1xf32>
    %336 = vector.shape_cast %332 : vector<2x256xf32> to vector<1x2x256xf32>
    %cst_234 = arith.constant dense<0.000000e+00> : vector<1xf32>
    %337 = vector.multi_reduction <add>, %336, %cst_234 [1, 2] : vector<1x2x256xf32> to vector<1xf32>
    %338 = vector.shape_cast %337 : vector<1xf32> to vector<1x1x1xf32>
    %339 = vector.extract %338[0, 0, 0] : f32 from vector<1x1x1xf32>
    %340 = vector.broadcast %339 : f32 to vector<1x1xf32>
    %341 = arith.addf %335, %340 : vector<1x1xf32>
    %c0_235 = arith.constant 0 : index
    %c6_236 = arith.constant 6 : index
    %c0_237 = arith.constant 0 : index
    %c0_238 = arith.constant 0 : index
    %342 = vector.load %arg12[%c0_235, %c6_236, %c0_237, %c0_238] : memref<1x9x1x1xf32, #tpu.memory_space<vmem>>, vector<1x1x1x1xf32>
    %343 = vector.shape_cast %342 : vector<1x1x1x1xf32> to vector<1x1xf32>
    %344 = vector.shape_cast %341 : vector<1x1xf32> to vector<1x1x1x1xf32>
    tpu.vector_store %arg12[%c0_235, %c6_236, %c0_237, %c0_238], %344 {strides = array<i32>} : memref<1x9x1x1xf32, #tpu.memory_space<vmem>>, vector<1x1x1x1xf32>,
    %c0_239 = arith.constant 0 : index
    %c6_240 = arith.constant 6 : index
    %c0_241 = arith.constant 0 : index
    %c0_242 = arith.constant 0 : index
    %345 = vector.load %arg13[%c0_239, %c6_240, %c0_241, %c0_242] : memref<1x9x2x1xf32, #tpu.memory_space<vmem>>, vector<1x1x2x1xf32>
    %346 = vector.shape_cast %345 : vector<1x1x2x1xf32> to vector<2x1xf32>
    %cst_243 = arith.constant dense<0.000000e+00> : vector<2xf32>
    %347 = vector.multi_reduction <add>, %333, %cst_243 [1] : vector<2x256xf32> to vector<2xf32>
    %348 = vector.shape_cast %347 : vector<2xf32> to vector<2x1xf32>
    %349 = arith.addf %346, %348 : vector<2x1xf32>
    %c0_244 = arith.constant 0 : index
    %c6_245 = arith.constant 6 : index
    %c0_246 = arith.constant 0 : index
    %c0_247 = arith.constant 0 : index
    %350 = vector.load %arg13[%c0_244, %c6_245, %c0_246, %c0_247] : memref<1x9x2x1xf32, #tpu.memory_space<vmem>>, vector<1x1x2x1xf32>
    %351 = vector.shape_cast %350 : vector<1x1x2x1xf32> to vector<2x1xf32>
    %352 = vector.shape_cast %349 : vector<2x1xf32> to vector<1x1x2x1xf32>
    tpu.vector_store %arg13[%c0_244, %c6_245, %c0_246, %c0_247], %352 {strides = array<i32>} : memref<1x9x2x1xf32, #tpu.memory_space<vmem>>, vector<1x1x2x1xf32>,
    %c0_248 = arith.constant 0 : index
    %c6_249 = arith.constant 6 : index
    %c0_250 = arith.constant 0 : index
    %c0_251 = arith.constant 0 : index
    %353 = vector.load %arg14[%c0_248, %c6_249, %c0_250, %c0_251] : memref<1x9x2x1xf32, #tpu.memory_space<vmem>>, vector<1x1x2x1xf32>
    %354 = vector.shape_cast %353 : vector<1x1x2x1xf32> to vector<2x1xf32>
    %cst_252 = arith.constant dense<0.000000e+00> : vector<2xf32>
    %355 = vector.multi_reduction <add>, %319, %cst_252 [1] : vector<2x256xf32> to vector<2xf32>
    %356 = vector.shape_cast %355 : vector<2xf32> to vector<2x1xf32>
    %357 = arith.addf %354, %356 : vector<2x1xf32>
    %c0_253 = arith.constant 0 : index
    %c6_254 = arith.constant 6 : index
    %c0_255 = arith.constant 0 : index
    %c0_256 = arith.constant 0 : index
    %358 = vector.load %arg14[%c0_253, %c6_254, %c0_255, %c0_256] : memref<1x9x2x1xf32, #tpu.memory_space<vmem>>, vector<1x1x2x1xf32>
    %359 = vector.shape_cast %358 : vector<1x1x2x1xf32> to vector<2x1xf32>
    %360 = vector.shape_cast %357 : vector<2x1xf32> to vector<1x1x2x1xf32>
    tpu.vector_store %arg14[%c0_253, %c6_254, %c0_255, %c0_256], %360 {strides = array<i32>} : memref<1x9x2x1xf32, #tpu.memory_space<vmem>>, vector<1x1x2x1xf32>,
    %c0_257 = arith.constant 0 : index
    %c0_258 = arith.constant 0 : index
    %361 = vector.load %arg10[%c0_257, %c0_258] : memref<2x256xf32, #tpu.memory_space<vmem>>, vector<2x256xf32>
    %cst_259 = arith.constant 0.000000e+00 : f32
    %362 = vector.broadcast %cst_259 : f32 to vector<2x256xf32>
    %363 = arith.subf %362, %361 : vector<2x256xf32>
    %364 = math.exp %363 : vector<2x256xf32>
    %cst_260 = arith.constant 1.000000e+00 : f32
    %365 = vector.broadcast %cst_260 : f32 to vector<2x256xf32>
    %366 = arith.addf %365, %364 : vector<2x256xf32>
    %cst_261 = arith.constant 1.000000e+00 : f32
    %367 = vector.broadcast %cst_261 : f32 to vector<2x256xf32>
    %368 = arith.divf %367, %366 : vector<2x256xf32>
    %369 = math.log %366 : vector<2x256xf32>
    %cst_262 = arith.constant 0.000000e+00 : f32
    %370 = vector.broadcast %cst_262 : f32 to vector<2x256xf32>
    %371 = arith.subf %370, %369 : vector<2x256xf32>
    %cst_263 = arith.constant -1.000000e+02 : f32
    %372 = vector.broadcast %cst_263 : f32 to vector<2x256xf32>
    %373 = arith.maximumf %371, %372 : vector<2x256xf32>
    %cst_264 = arith.constant 1.000000e+00 : f32
    %374 = vector.broadcast %cst_264 : f32 to vector<2x256xf32>
    %375 = arith.subf %374, %368 : vector<2x256xf32>
    %376 = math.log %375 : vector<2x256xf32>
    %cst_265 = arith.constant -1.000000e+02 : f32
    %377 = vector.broadcast %cst_265 : f32 to vector<2x256xf32>
    %378 = arith.maximumf %376, %377 : vector<2x256xf32>
    %379 = arith.mulf %7, %373 : vector<2x256xf32>
    %380 = arith.mulf %9, %378 : vector<2x256xf32>
    %381 = arith.addf %379, %380 : vector<2x256xf32>
    %382 = arith.mulf %368, %7 : vector<2x256xf32>
    %c0_266 = arith.constant 0 : index
    %c7 = arith.constant 7 : index
    %c0_267 = arith.constant 0 : index
    %c0_268 = arith.constant 0 : index
    %383 = vector.load %arg12[%c0_266, %c7, %c0_267, %c0_268] : memref<1x9x1x1xf32, #tpu.memory_space<vmem>>, vector<1x1x1x1xf32>
    %384 = vector.shape_cast %383 : vector<1x1x1x1xf32> to vector<1x1xf32>
    %385 = vector.shape_cast %381 : vector<2x256xf32> to vector<1x2x256xf32>
    %cst_269 = arith.constant dense<0.000000e+00> : vector<1xf32>
    %386 = vector.multi_reduction <add>, %385, %cst_269 [1, 2] : vector<1x2x256xf32> to vector<1xf32>
    %387 = vector.shape_cast %386 : vector<1xf32> to vector<1x1x1xf32>
    %388 = vector.extract %387[0, 0, 0] : f32 from vector<1x1x1xf32>
    %389 = vector.broadcast %388 : f32 to vector<1x1xf32>
    %390 = arith.addf %384, %389 : vector<1x1xf32>
    %c0_270 = arith.constant 0 : index
    %c7_271 = arith.constant 7 : index
    %c0_272 = arith.constant 0 : index
    %c0_273 = arith.constant 0 : index
    %391 = vector.load %arg12[%c0_270, %c7_271, %c0_272, %c0_273] : memref<1x9x1x1xf32, #tpu.memory_space<vmem>>, vector<1x1x1x1xf32>
    %392 = vector.shape_cast %391 : vector<1x1x1x1xf32> to vector<1x1xf32>
    %393 = vector.shape_cast %390 : vector<1x1xf32> to vector<1x1x1x1xf32>
    tpu.vector_store %arg12[%c0_270, %c7_271, %c0_272, %c0_273], %393 {strides = array<i32>} : memref<1x9x1x1xf32, #tpu.memory_space<vmem>>, vector<1x1x1x1xf32>,
    %c0_274 = arith.constant 0 : index
    %c7_275 = arith.constant 7 : index
    %c0_276 = arith.constant 0 : index
    %c0_277 = arith.constant 0 : index
    %394 = vector.load %arg13[%c0_274, %c7_275, %c0_276, %c0_277] : memref<1x9x2x1xf32, #tpu.memory_space<vmem>>, vector<1x1x2x1xf32>
    %395 = vector.shape_cast %394 : vector<1x1x2x1xf32> to vector<2x1xf32>
    %cst_278 = arith.constant dense<0.000000e+00> : vector<2xf32>
    %396 = vector.multi_reduction <add>, %382, %cst_278 [1] : vector<2x256xf32> to vector<2xf32>
    %397 = vector.shape_cast %396 : vector<2xf32> to vector<2x1xf32>
    %398 = arith.addf %395, %397 : vector<2x1xf32>
    %c0_279 = arith.constant 0 : index
    %c7_280 = arith.constant 7 : index
    %c0_281 = arith.constant 0 : index
    %c0_282 = arith.constant 0 : index
    %399 = vector.load %arg13[%c0_279, %c7_280, %c0_281, %c0_282] : memref<1x9x2x1xf32, #tpu.memory_space<vmem>>, vector<1x1x2x1xf32>
    %400 = vector.shape_cast %399 : vector<1x1x2x1xf32> to vector<2x1xf32>
    %401 = vector.shape_cast %398 : vector<2x1xf32> to vector<1x1x2x1xf32>
    tpu.vector_store %arg13[%c0_279, %c7_280, %c0_281, %c0_282], %401 {strides = array<i32>} : memref<1x9x2x1xf32, #tpu.memory_space<vmem>>, vector<1x1x2x1xf32>,
    %c0_283 = arith.constant 0 : index
    %c7_284 = arith.constant 7 : index
    %c0_285 = arith.constant 0 : index
    %c0_286 = arith.constant 0 : index
    %402 = vector.load %arg14[%c0_283, %c7_284, %c0_285, %c0_286] : memref<1x9x2x1xf32, #tpu.memory_space<vmem>>, vector<1x1x2x1xf32>
    %403 = vector.shape_cast %402 : vector<1x1x2x1xf32> to vector<2x1xf32>
    %cst_287 = arith.constant dense<0.000000e+00> : vector<2xf32>
    %404 = vector.multi_reduction <add>, %368, %cst_287 [1] : vector<2x256xf32> to vector<2xf32>
    %405 = vector.shape_cast %404 : vector<2xf32> to vector<2x1xf32>
    %406 = arith.addf %403, %405 : vector<2x1xf32>
    %c0_288 = arith.constant 0 : index
    %c7_289 = arith.constant 7 : index
    %c0_290 = arith.constant 0 : index
    %c0_291 = arith.constant 0 : index
    %407 = vector.load %arg14[%c0_288, %c7_289, %c0_290, %c0_291] : memref<1x9x2x1xf32, #tpu.memory_space<vmem>>, vector<1x1x2x1xf32>
    %408 = vector.shape_cast %407 : vector<1x1x2x1xf32> to vector<2x1xf32>
    %409 = vector.shape_cast %406 : vector<2x1xf32> to vector<1x1x2x1xf32>
    tpu.vector_store %arg14[%c0_288, %c7_289, %c0_290, %c0_291], %409 {strides = array<i32>} : memref<1x9x2x1xf32, #tpu.memory_space<vmem>>, vector<1x1x2x1xf32>,
    %c0_292 = arith.constant 0 : index
    %c0_293 = arith.constant 0 : index
    %410 = vector.load %arg11[%c0_292, %c0_293] : memref<2x256xf32, #tpu.memory_space<vmem>>, vector<2x256xf32>
    %cst_294 = arith.constant 0.000000e+00 : f32
    %411 = vector.broadcast %cst_294 : f32 to vector<2x256xf32>
    %412 = arith.subf %411, %410 : vector<2x256xf32>
    %413 = math.exp %412 : vector<2x256xf32>
    %cst_295 = arith.constant 1.000000e+00 : f32
    %414 = vector.broadcast %cst_295 : f32 to vector<2x256xf32>
    %415 = arith.addf %414, %413 : vector<2x256xf32>
    %cst_296 = arith.constant 1.000000e+00 : f32
    %416 = vector.broadcast %cst_296 : f32 to vector<2x256xf32>
    %417 = arith.divf %416, %415 : vector<2x256xf32>
    %418 = math.log %415 : vector<2x256xf32>
    %cst_297 = arith.constant 0.000000e+00 : f32
    %419 = vector.broadcast %cst_297 : f32 to vector<2x256xf32>
    %420 = arith.subf %419, %418 : vector<2x256xf32>
    %cst_298 = arith.constant -1.000000e+02 : f32
    %421 = vector.broadcast %cst_298 : f32 to vector<2x256xf32>
    %422 = arith.maximumf %420, %421 : vector<2x256xf32>
    %cst_299 = arith.constant 1.000000e+00 : f32
    %423 = vector.broadcast %cst_299 : f32 to vector<2x256xf32>
    %424 = arith.subf %423, %417 : vector<2x256xf32>
    %425 = math.log %424 : vector<2x256xf32>
    %cst_300 = arith.constant -1.000000e+02 : f32
    %426 = vector.broadcast %cst_300 : f32 to vector<2x256xf32>
    %427 = arith.maximumf %425, %426 : vector<2x256xf32>
    %428 = arith.mulf %7, %422 : vector<2x256xf32>
    %429 = arith.mulf %9, %427 : vector<2x256xf32>
    %430 = arith.addf %428, %429 : vector<2x256xf32>
    %431 = arith.mulf %417, %7 : vector<2x256xf32>
    %c0_301 = arith.constant 0 : index
    %c8 = arith.constant 8 : index
    %c0_302 = arith.constant 0 : index
    %c0_303 = arith.constant 0 : index
    %432 = vector.load %arg12[%c0_301, %c8, %c0_302, %c0_303] : memref<1x9x1x1xf32, #tpu.memory_space<vmem>>, vector<1x1x1x1xf32>
    %433 = vector.shape_cast %432 : vector<1x1x1x1xf32> to vector<1x1xf32>
    %434 = vector.shape_cast %430 : vector<2x256xf32> to vector<1x2x256xf32>
    %cst_304 = arith.constant dense<0.000000e+00> : vector<1xf32>
    %435 = vector.multi_reduction <add>, %434, %cst_304 [1, 2] : vector<1x2x256xf32> to vector<1xf32>
    %436 = vector.shape_cast %435 : vector<1xf32> to vector<1x1x1xf32>
    %437 = vector.extract %436[0, 0, 0] : f32 from vector<1x1x1xf32>
    %438 = vector.broadcast %437 : f32 to vector<1x1xf32>
    %439 = arith.addf %433, %438 : vector<1x1xf32>
    %c0_305 = arith.constant 0 : index
    %c8_306 = arith.constant 8 : index
    %c0_307 = arith.constant 0 : index
    %c0_308 = arith.constant 0 : index
    %440 = vector.load %arg12[%c0_305, %c8_306, %c0_307, %c0_308] : memref<1x9x1x1xf32, #tpu.memory_space<vmem>>, vector<1x1x1x1xf32>
    %441 = vector.shape_cast %440 : vector<1x1x1x1xf32> to vector<1x1xf32>
    %442 = vector.shape_cast %439 : vector<1x1xf32> to vector<1x1x1x1xf32>
    tpu.vector_store %arg12[%c0_305, %c8_306, %c0_307, %c0_308], %442 {strides = array<i32>} : memref<1x9x1x1xf32, #tpu.memory_space<vmem>>, vector<1x1x1x1xf32>,
    %c0_309 = arith.constant 0 : index
    %c8_310 = arith.constant 8 : index
    %c0_311 = arith.constant 0 : index
    %c0_312 = arith.constant 0 : index
    %443 = vector.load %arg13[%c0_309, %c8_310, %c0_311, %c0_312] : memref<1x9x2x1xf32, #tpu.memory_space<vmem>>, vector<1x1x2x1xf32>
    %444 = vector.shape_cast %443 : vector<1x1x2x1xf32> to vector<2x1xf32>
    %cst_313 = arith.constant dense<0.000000e+00> : vector<2xf32>
    %445 = vector.multi_reduction <add>, %431, %cst_313 [1] : vector<2x256xf32> to vector<2xf32>
    %446 = vector.shape_cast %445 : vector<2xf32> to vector<2x1xf32>
    %447 = arith.addf %444, %446 : vector<2x1xf32>
    %c0_314 = arith.constant 0 : index
    %c8_315 = arith.constant 8 : index
    %c0_316 = arith.constant 0 : index
    %c0_317 = arith.constant 0 : index
    %448 = vector.load %arg13[%c0_314, %c8_315, %c0_316, %c0_317] : memref<1x9x2x1xf32, #tpu.memory_space<vmem>>, vector<1x1x2x1xf32>
    %449 = vector.shape_cast %448 : vector<1x1x2x1xf32> to vector<2x1xf32>
    %450 = vector.shape_cast %447 : vector<2x1xf32> to vector<1x1x2x1xf32>
    tpu.vector_store %arg13[%c0_314, %c8_315, %c0_316, %c0_317], %450 {strides = array<i32>} : memref<1x9x2x1xf32, #tpu.memory_space<vmem>>, vector<1x1x2x1xf32>,
    %c0_318 = arith.constant 0 : index
    %c8_319 = arith.constant 8 : index
    %c0_320 = arith.constant 0 : index
    %c0_321 = arith.constant 0 : index
    %451 = vector.load %arg14[%c0_318, %c8_319, %c0_320, %c0_321] : memref<1x9x2x1xf32, #tpu.memory_space<vmem>>, vector<1x1x2x1xf32>
    %452 = vector.shape_cast %451 : vector<1x1x2x1xf32> to vector<2x1xf32>
    %cst_322 = arith.constant dense<0.000000e+00> : vector<2xf32>
    %453 = vector.multi_reduction <add>, %417, %cst_322 [1] : vector<2x256xf32> to vector<2xf32>
    %454 = vector.shape_cast %453 : vector<2xf32> to vector<2x1xf32>
    %455 = arith.addf %452, %454 : vector<2x1xf32>
    %c0_323 = arith.constant 0 : index
    %c8_324 = arith.constant 8 : index
    %c0_325 = arith.constant 0 : index
    %c0_326 = arith.constant 0 : index
    %456 = vector.load %arg14[%c0_323, %c8_324, %c0_325, %c0_326] : memref<1x9x2x1xf32, #tpu.memory_space<vmem>>, vector<1x1x2x1xf32>
    %457 = vector.shape_cast %456 : vector<1x1x2x1xf32> to vector<2x1xf32>
    %458 = vector.shape_cast %455 : vector<2x1xf32> to vector<1x1x2x1xf32>
    tpu.vector_store %arg14[%c0_323, %c8_324, %c0_325, %c0_326], %458 {strides = array<i32>} : memref<1x9x2x1xf32, #tpu.memory_space<vmem>>, vector<1x1x2x1xf32>,
    return
  }
  func.func @transform_0(%arg0: i32, %arg1: i32) -> (i32, i32) {
    %c2_i32 = arith.constant 2 : i32
    %0 = arith.muli %arg0, %c2_i32 : i32
    %1 = arith.addi %0, %arg1 : i32
    %c0_i32 = arith.constant 0 : i32
    %c0_i32_0 = arith.constant 0 : i32
    return %c0_i32, %1 : i32, i32
  }
  func.func @transform_1(%arg0: i32, %arg1: i32) -> (i32, i32) {
    %c2_i32 = arith.constant 2 : i32
    %0 = arith.muli %arg0, %c2_i32 : i32
    %1 = arith.addi %0, %arg1 : i32
    %c0_i32 = arith.constant 0 : i32
    %c0_i32_0 = arith.constant 0 : i32
    return %c0_i32, %1 : i32, i32
  }
  func.func @transform_2(%arg0: i32, %arg1: i32) -> (i32, i32) {
    %c2_i32 = arith.constant 2 : i32
    %0 = arith.muli %arg0, %c2_i32 : i32
    %1 = arith.addi %0, %arg1 : i32
    %c0_i32 = arith.constant 0 : i32
    %c0_i32_0 = arith.constant 0 : i32
    return %c0_i32, %1 : i32, i32
  }
  func.func @transform_3(%arg0: i32, %arg1: i32) -> (i32, i32) {
    %c2_i32 = arith.constant 2 : i32
    %0 = arith.muli %arg0, %c2_i32 : i32
    %1 = arith.addi %0, %arg1 : i32
    %c0_i32 = arith.constant 0 : i32
    %c0_i32_0 = arith.constant 0 : i32
    return %c0_i32, %1 : i32, i32
  }
  func.func @transform_4(%arg0: i32, %arg1: i32) -> (i32, i32) {
    %c2_i32 = arith.constant 2 : i32
    %0 = arith.muli %arg0, %c2_i32 : i32
    %1 = arith.addi %0, %arg1 : i32
    %c0_i32 = arith.constant 0 : i32
    %c0_i32_0 = arith.constant 0 : i32
    return %c0_i32, %1 : i32, i32
  }
  func.func @transform_5(%arg0: i32, %arg1: i32) -> (i32, i32) {
    %c2_i32 = arith.constant 2 : i32
    %0 = arith.muli %arg0, %c2_i32 : i32
    %1 = arith.addi %0, %arg1 : i32
    %c0_i32 = arith.constant 0 : i32
    %c0_i32_0 = arith.constant 0 : i32
    return %c0_i32, %1 : i32, i32
  }
  func.func @transform_6(%arg0: i32, %arg1: i32) -> (i32, i32) {
    %c2_i32 = arith.constant 2 : i32
    %0 = arith.muli %arg0, %c2_i32 : i32
    %1 = arith.addi %0, %arg1 : i32
    %c0_i32 = arith.constant 0 : i32
    %c0_i32_0 = arith.constant 0 : i32
    return %c0_i32, %1 : i32, i32
  }
  func.func @transform_7(%arg0: i32, %arg1: i32) -> (i32, i32) {
    %c2_i32 = arith.constant 2 : i32
    %0 = arith.muli %arg0, %c2_i32 : i32
    %1 = arith.addi %0, %arg1 : i32
    %c0_i32 = arith.constant 0 : i32
    %c0_i32_0 = arith.constant 0 : i32
    return %c0_i32, %1 : i32, i32
  }
  func.func @transform_8(%arg0: i32, %arg1: i32) -> (i32, i32) {
    %c2_i32 = arith.constant 2 : i32
    %0 = arith.muli %arg0, %c2_i32 : i32
    %1 = arith.addi %0, %arg1 : i32
    %c0_i32 = arith.constant 0 : i32
    %c0_i32_0 = arith.constant 0 : i32
    return %c0_i32, %1 : i32, i32
  }
  func.func @transform_9(%arg0: i32, %arg1: i32) -> (i32, i32) {
    %c2_i32 = arith.constant 2 : i32
    %0 = arith.muli %arg0, %c2_i32 : i32
    %1 = arith.addi %0, %arg1 : i32
    %c0_i32 = arith.constant 0 : i32
    %c0_i32_0 = arith.constant 0 : i32
    return %c0_i32, %1 : i32, i32
  }
  func.func @transform_10(%arg0: i32, %arg1: i32) -> (i32, i32, i32, i32) {
    %c0_i32 = arith.constant 0 : i32
    %c0_i32_0 = arith.constant 0 : i32
    %c0_i32_1 = arith.constant 0 : i32
    %c0_i32_2 = arith.constant 0 : i32
    return %arg0, %c0_i32, %c0_i32_0, %c0_i32_1 : i32, i32, i32, i32
  }
  func.func @transform_11(%arg0: i32, %arg1: i32) -> (i32, i32, i32, i32) {
    %c0_i32 = arith.constant 0 : i32
    %c0_i32_0 = arith.constant 0 : i32
    %c0_i32_1 = arith.constant 0 : i32
    %c0_i32_2 = arith.constant 0 : i32
    return %arg0, %c0_i32, %c0_i32_0, %c0_i32_1 : i32, i32, i32, i32
  }
  func.func @transform_12(%arg0: i32, %arg1: i32) -> (i32, i32, i32, i32) {
    %c0_i32 = arith.constant 0 : i32
    %c0_i32_0 = arith.constant 0 : i32
    %c0_i32_1 = arith.constant 0 : i32
    %c0_i32_2 = arith.constant 0 : i32
    return %arg0, %c0_i32, %c0_i32_0, %c0_i32_1 : i32, i32, i32, i32
  }
  func.func @transform_13(%arg0: i32, %arg1: i32) -> (i32, i32, i32) {
    %c0_i32 = arith.constant 0 : i32
    %c0_i32_0 = arith.constant 0 : i32
    %c0_i32_1 = arith.constant 0 : i32
    return %arg0, %c0_i32, %c0_i32_0 : i32, i32, i32
  }
}

</mosaic_0001>

<llo_original>
// kernel: _lambda_.1
$region0: #{_lambda_.1}
  #allocation0 [shape = 'u32[]', space=smem, size = 0x4, offset = 0x4, fixed_abs, tag = 'smem constant byte address 0x4 - core index']
  #allocation1 [shape = 'u32[144,128]{1,0:T(1,128)}', space=vmem, size = 0x12000, scoped, tag = 'internal scratch']
  %s0 = inlined_call_operand.vmem [shape: f32[2,1024], index: 0, kind: input, shape index: {}]
  %s1 = inlined_call_operand.vmem [shape: f32[2,1024], index: 1, kind: input, shape index: {}]
  %s2 = inlined_call_operand.vmem [shape: f32[2,1024], index: 2, kind: input, shape index: {}]
  %s3 = inlined_call_operand.vmem [shape: f32[2,1024], index: 3, kind: input, shape index: {}]
  %s4 = inlined_call_operand.vmem [shape: f32[2,1024], index: 4, kind: input, shape index: {}]
  %s5 = inlined_call_operand.vmem [shape: f32[2,1024], index: 5, kind: input, shape index: {}]
  %s6 = inlined_call_operand.vmem [shape: f32[2,1024], index: 6, kind: input, shape index: {}]
  %s7 = inlined_call_operand.vmem [shape: f32[2,1024], index: 7, kind: input, shape index: {}]
  %s8 = inlined_call_operand.vmem [shape: f32[2,1024], index: 8, kind: input, shape index: {}]
  %s9 = inlined_call_operand.vmem [shape: f32[2,1024], index: 9, kind: input, shape index: {}]
  %s10 = inlined_call_operand.vmem [shape: f32[2,9,1,1], index: 10, kind: output, shape index: {0}]
  %s11 = inlined_call_operand.vmem [shape: f32[2,9,2,1], index: 11, kind: output, shape index: {1}]
  %s12 = inlined_call_operand.vmem [shape: f32[2,9,2,1], index: 12, kind: output, shape index: {2}]
  %s13 = inlined_call_operand.vmem [shape: f32[2,2,1], index: 13, kind: output, shape index: {3}]
  %14 = xla_tuple %s10, %s11, %s12, %s13
  %s15 = sld [smem:[#allocation0]]
  $region101: #{_lambda_.1} parent=0
    _
  %s17 = ssub.s32 1, %s15
  %s18 = scalar_select 0, %s17, %s15
  loop: start=0, step=1, limit=6
  $region2: #{_lambda_.1} parent=0 // loop_pre_header
    _
  $region3: #{_lambda_.1} parent=0 // loop_header
    %s20 = sphi 0, %s24
    %p21 = scmp.ge.s32.totalorder %s20, 6
    %s27 = sphi 0, %s39
    %s28 = sphi 0, %s35
    %s29 = sphi 0, %s27
    %s30 = sphi 0, %s28
    %s31 = sphi 0, %s29
    %s32 = sphi 0, %s30
    %s46 = sphi 0, %s48
    %s49 = sphi 0, %s46
    %s50 = sphi 0, %s49
    %s66 = sphi 0, %s50
    %s76 = sphi 0, %s78
    %s79 = sphi 0, %s76
    %s80 = sphi 0, %s79
    %s96 = sphi 0, %s80
    %s106 = sphi 0, %s108
    %s109 = sphi 0, %s106
    %s110 = sphi 0, %s109
    %s126 = sphi 0, %s110
    %s136 = sphi 0, %s138
    %s139 = sphi 0, %s136
    %s140 = sphi 0, %s139
    %s156 = sphi 0, %s140
    %s166 = sphi 0, %s168
    %s169 = sphi 0, %s166
    %s170 = sphi 0, %s169
    %s186 = sphi 0, %s170
    %s196 = sphi 0, %s198
    %s199 = sphi 0, %s196
    %s200 = sphi 0, %s199
    %s216 = sphi 0, %s200
    %s226 = sphi 0, %s228
    %s229 = sphi 0, %s226
    %s230 = sphi 0, %s229
    %s246 = sphi 0, %s230
    %s256 = sphi 0, %s258
    %s259 = sphi 0, %s256
    %s260 = sphi 0, %s259
    %s276 = sphi 0, %s260
    %s286 = sphi 0, %s288
    %s289 = sphi 0, %s286
    %s290 = sphi 0, %s289
    %s306 = sphi 0, %s290
    %s316 = sphi 0, %s318
    %s319 = sphi 0, %s316
    %s320 = sphi 0, %s319
    %s336 = sphi 0, %s320
    %s342 = sphi 0, %s344
    %s345 = sphi 0, %s342
    %s346 = sphi 0, %s345
    %s362 = sphi 0, %s346
    %s368 = sphi 0, %s370
    %s371 = sphi 0, %s368
    %s372 = sphi 0, %s371
    %s388 = sphi 0, %s372
    %s394 = sphi 0, %s396
    %s397 = sphi 0, %s394
    %s398 = sphi 0, %s397
    %s414 = sphi 0, %s398
    %s420 = sphi 0, %s422
    %s423 = sphi 0, %s420
    %s424 = sphi 0, %s423
    %s440 = sphi 0, %s424
  $region4: #{_lambda_.1} parent=0 // loop_header_branch
    %23 = sbr.rel (%p21) target = $region8
  $region5: #{_lambda_.1} parent=0 // loop_body
    %s25 = ssub.s32 %s20, 1
    %s26 = ssub.s32 %s20, 2
    %s33 = sadd.s32 1, %s28
    %p34 = scmp.ge.s32.totalorder %s33, 2
    %s35 = scalar_select %p34, 0, %s33
    %s36 = sadd.s32 1, %s27
    %s37 = scalar_select %p34, %s36, %s27
    %p38 = scmp.ge.s32.totalorder %s37, 2
    %s39 = scalar_select %p38, 0, %s37
    %s40 = smul.u32 %s27, 2
    %s41 = sadd.s32 %s40, %s28
    %s42 = smul.u32 %s39, 2
    %s43 = sadd.s32 %s42, %s35
    %s44 = ssub.s32 %s41, %s43
    %p45 = scmp.eq.s32.totalorder %s44, 0
    %s47 = sadd.s32 %s46, 1
    %s48 = scalar_select %p45, %s46, %s47
    %p51 = pneg %p45
    %p52 = scmp.eq.s32.totalorder %s20, 3
    %p53 = por %p51, %p52
    %p54 = scmp.ne.s32.totalorder %s46, %s49
    %p55 = scmp.eq.s32.totalorder %s20, 0
    %p56 = por %p54, %p55
    %p57 = scmp.ne.s32.totalorder %s46, %s49
    %p58 = scmp.eq.s32.totalorder %s25, 3
    %p59 = por %p57, %p58
    %p60 = scmp.ne.s32.totalorder %s49, %s50
    %p61 = scmp.eq.s32.totalorder %s25, 0
    %p62 = por %p60, %p61
    %p63 = scmp.ne.s32.totalorder %s49, %s50
    %p64 = scmp.eq.s32.totalorder %s26, 3
    %p65 = por %p63, %p64
    %p67 = scmp.ne.s32.totalorder %s50, %s66
    %p68 = scmp.eq.s32.totalorder %s26, 0
    %p69 = por %p67, %p68
    %s70 = smul.u32 %s27, 2
    %s71 = sadd.s32 %s70, %s28
    %s72 = smul.u32 %s39, 2
    %s73 = sadd.s32 %s72, %s35
    %s74 = ssub.s32 %s71, %s73
    %p75 = scmp.eq.s32.totalorder %s74, 0
    %s77 = sadd.s32 %s76, 1
    %s78 = scalar_select %p75, %s76, %s77
    %p81 = pneg %p75
    %p82 = scmp.eq.s32.totalorder %s20, 3
    %p83 = por %p81, %p82
    %p84 = scmp.ne.s32.totalorder %s76, %s79
    %p85 = scmp.eq.s32.totalorder %s20, 0
    %p86 = por %p84, %p85
    %p87 = scmp.ne.s32.totalorder %s76, %s79
    %p88 = scmp.eq.s32.totalorder %s25, 3
    %p89 = por %p87, %p88
    %p90 = scmp.ne.s32.totalorder %s79, %s80
    %p91 = scmp.eq.s32.totalorder %s25, 0
    %p92 = por %p90, %p91
    %p93 = scmp.ne.s32.totalorder %s79, %s80
    %p94 = scmp.eq.s32.totalorder %s26, 3
    %p95 = por %p93, %p94
    %p97 = scmp.ne.s32.totalorder %s80, %s96
    %p98 = scmp.eq.s32.totalorder %s26, 0
    %p99 = por %p97, %p98
    %s100 = smul.u32 %s27, 2
    %s101 = sadd.s32 %s100, %s28
    %s102 = smul.u32 %s39, 2
    %s103 = sadd.s32 %s102, %s35
    %s104 = ssub.s32 %s101, %s103
    %p105 = scmp.eq.s32.totalorder %s104, 0
    %s107 = sadd.s32 %s106, 1
    %s108 = scalar_select %p105, %s106, %s107
    %p111 = pneg %p105
    %p112 = scmp.eq.s32.totalorder %s20, 3
    %p113 = por %p111, %p112
    %p114 = scmp.ne.s32.totalorder %s106, %s109
    %p115 = scmp.eq.s32.totalorder %s20, 0
    %p116 = por %p114, %p115
    %p117 = scmp.ne.s32.totalorder %s106, %s109
    %p118 = scmp.eq.s32.totalorder %s25, 3
    %p119 = por %p117, %p118
    %p120 = scmp.ne.s32.totalorder %s109, %s110
    %p121 = scmp.eq.s32.totalorder %s25, 0
    %p122 = por %p120, %p121
    %p123 = scmp.ne.s32.totalorder %s109, %s110
    %p124 = scmp.eq.s32.totalorder %s26, 3
    %p125 = por %p123, %p124
    %p127 = scmp.ne.s32.totalorder %s110, %s126
    %p128 = scmp.eq.s32.totalorder %s26, 0
    %p129 = por %p127, %p128
    %s130 = smul.u32 %s27, 2
    %s131 = sadd.s32 %s130, %s28
    %s132 = smul.u32 %s39, 2
    %s133 = sadd.s32 %s132, %s35
    %s134 = ssub.s32 %s131, %s133
    %p135 = scmp.eq.s32.totalorder %s134, 0
    %s137 = sadd.s32 %s136, 1
    %s138 = scalar_select %p135, %s136, %s137
    %p141 = pneg %p135
    %p142 = scmp.eq.s32.totalorder %s20, 3
    %p143 = por %p141, %p142
    %p144 = scmp.ne.s32.totalorder %s136, %s139
    %p145 = scmp.eq.s32.totalorder %s20, 0
    %p146 = por %p144, %p145
    %p147 = scmp.ne.s32.totalorder %s136, %s139
    %p148 = scmp.eq.s32.totalorder %s25, 3
    %p149 = por %p147, %p148
    %p150 = scmp.ne.s32.totalorder %s139, %s140
    %p151 = scmp.eq.s32.totalorder %s25, 0
    %p152 = por %p150, %p151
    %p153 = scmp.ne.s32.totalorder %s139, %s140
    %p154 = scmp.eq.s32.totalorder %s26, 3
    %p155 = por %p153, %p154
    %p157 = scmp.ne.s32.totalorder %s140, %s156
    %p158 = scmp.eq.s32.totalorder %s26, 0
    %p159 = por %p157, %p158
    %s160 = smul.u32 %s27, 2
    %s161 = sadd.s32 %s160, %s28
    %s162 = smul.u32 %s39, 2
    %s163 = sadd.s32 %s162, %s35
    %s164 = ssub.s32 %s161, %s163
    %p165 = scmp.eq.s32.totalorder %s164, 0
    %s167 = sadd.s32 %s166, 1
    %s168 = scalar_select %p165, %s166, %s167
    %p171 = pneg %p165
    %p172 = scmp.eq.s32.totalorder %s20, 3
    %p173 = por %p171, %p172
    %p174 = scmp.ne.s32.totalorder %s166, %s169
    %p175 = scmp.eq.s32.totalorder %s20, 0
    %p176 = por %p174, %p175
    %p177 = scmp.ne.s32.totalorder %s166, %s169
    %p178 = scmp.eq.s32.totalorder %s25, 3
    %p179 = por %p177, %p178
    %p180 = scmp.ne.s32.totalorder %s169, %s170
    %p181 = scmp.eq.s32.totalorder %s25, 0
    %p182 = por %p180, %p181
    %p183 = scmp.ne.s32.totalorder %s169, %s170
    %p184 = scmp.eq.s32.totalorder %s26, 3
    %p185 = por %p183, %p184
    %p187 = scmp.ne.s32.totalorder %s170, %s186
    %p188 = scmp.eq.s32.totalorder %s26, 0
    %p189 = por %p187, %p188
    %s190 = smul.u32 %s27, 2
    %s191 = sadd.s32 %s190, %s28
    %s192 = smul.u32 %s39, 2
    %s193 = sadd.s32 %s192, %s35
    %s194 = ssub.s32 %s191, %s193
    %p195 = scmp.eq.s32.totalorder %s194, 0
    %s197 = sadd.s32 %s196, 1
    %s198 = scalar_select %p195, %s196, %s197
    %p201 = pneg %p195
    %p202 = scmp.eq.s32.totalorder %s20, 3
    %p203 = por %p201, %p202
    %p204 = scmp.ne.s32.totalorder %s196, %s199
    %p205 = scmp.eq.s32.totalorder %s20, 0
    %p206 = por %p204, %p205
    %p207 = scmp.ne.s32.totalorder %s196, %s199
    %p208 = scmp.eq.s32.totalorder %s25, 3
    %p209 = por %p207, %p208
    %p210 = scmp.ne.s32.totalorder %s199, %s200
    %p211 = scmp.eq.s32.totalorder %s25, 0
    %p212 = por %p210, %p211
    %p213 = scmp.ne.s32.totalorder %s199, %s200
    %p214 = scmp.eq.s32.totalorder %s26, 3
    %p215 = por %p213, %p214
    %p217 = scmp.ne.s32.totalorder %s200, %s216
    %p218 = scmp.eq.s32.totalorder %s26, 0
    %p219 = por %p217, %p218
    %s220 = smul.u32 %s27, 2
    %s221 = sadd.s32 %s220, %s28
    %s222 = smul.u32 %s39, 2
    %s223 = sadd.s32 %s222, %s35
    %s224 = ssub.s32 %s221, %s223
    %p225 = scmp.eq.s32.totalorder %s224, 0
    %s227 = sadd.s32 %s226, 1
    %s228 = scalar_select %p225, %s226, %s227
    %p231 = pneg %p225
    %p232 = scmp.eq.s32.totalorder %s20, 3
    %p233 = por %p231, %p232
    %p234 = scmp.ne.s32.totalorder %s226, %s229
    %p235 = scmp.eq.s32.totalorder %s20, 0
    %p236 = por %p234, %p235
    %p237 = scmp.ne.s32.totalorder %s226, %s229
    %p238 = scmp.eq.s32.totalorder %s25, 3
    %p239 = por %p237, %p238
    %p240 = scmp.ne.s32.totalorder %s229, %s230
    %p241 = scmp.eq.s32.totalorder %s25, 0
    %p242 = por %p240, %p241
    %p243 = scmp.ne.s32.totalorder %s229, %s230
    %p244 = scmp.eq.s32.totalorder %s26, 3
    %p245 = por %p243, %p244
    %p247 = scmp.ne.s32.totalorder %s230, %s246
    %p248 = scmp.eq.s32.totalorder %s26, 0
    %p249 = por %p247, %p248
    %s250 = smul.u32 %s27, 2
    %s251 = sadd.s32 %s250, %s28
    %s252 = smul.u32 %s39, 2
    %s253 = sadd.s32 %s252, %s35
    %s254 = ssub.s32 %s251, %s253
    %p255 = scmp.eq.s32.totalorder %s254, 0
    %s257 = sadd.s32 %s256, 1
    %s258 = scalar_select %p255, %s256, %s257
    %p261 = pneg %p255
    %p262 = scmp.eq.s32.totalorder %s20, 3
    %p263 = por %p261, %p262
    %p264 = scmp.ne.s32.totalorder %s256, %s259
    %p265 = scmp.eq.s32.totalorder %s20, 0
    %p266 = por %p264, %p265
    %p267 = scmp.ne.s32.totalorder %s256, %s259
    %p268 = scmp.eq.s32.totalorder %s25, 3
    %p269 = por %p267, %p268
    %p270 = scmp.ne.s32.totalorder %s259, %s260
    %p271 = scmp.eq.s32.totalorder %s25, 0
    %p272 = por %p270, %p271
    %p273 = scmp.ne.s32.totalorder %s259, %s260
    %p274 = scmp.eq.s32.totalorder %s26, 3
    %p275 = por %p273, %p274
    %p277 = scmp.ne.s32.totalorder %s260, %s276
    %p278 = scmp.eq.s32.totalorder %s26, 0
    %p279 = por %p277, %p278
    %s280 = smul.u32 %s27, 2
    %s281 = sadd.s32 %s280, %s28
    %s282 = smul.u32 %s39, 2
    %s283 = sadd.s32 %s282, %s35
    %s284 = ssub.s32 %s281, %s283
    %p285 = scmp.eq.s32.totalorder %s284, 0
    %s287 = sadd.s32 %s286, 1
    %s288 = scalar_select %p285, %s286, %s287
    %p291 = pneg %p285
    %p292 = scmp.eq.s32.totalorder %s20, 3
    %p293 = por %p291, %p292
    %p294 = scmp.ne.s32.totalorder %s286, %s289
    %p295 = scmp.eq.s32.totalorder %s20, 0
    %p296 = por %p294, %p295
    %p297 = scmp.ne.s32.totalorder %s286, %s289
    %p298 = scmp.eq.s32.totalorder %s25, 3
    %p299 = por %p297, %p298
    %p300 = scmp.ne.s32.totalorder %s289, %s290
    %p301 = scmp.eq.s32.totalorder %s25, 0
    %p302 = por %p300, %p301
    %p303 = scmp.ne.s32.totalorder %s289, %s290
    %p304 = scmp.eq.s32.totalorder %s26, 3
    %p305 = por %p303, %p304
    %p307 = scmp.ne.s32.totalorder %s290, %s306
    %p308 = scmp.eq.s32.totalorder %s26, 0
    %p309 = por %p307, %p308
    %s310 = smul.u32 %s27, 2
    %s311 = sadd.s32 %s310, %s28
    %s312 = smul.u32 %s39, 2
    %s313 = sadd.s32 %s312, %s35
    %s314 = ssub.s32 %s311, %s313
    %p315 = scmp.eq.s32.totalorder %s314, 0
    %s317 = sadd.s32 %s316, 1
    %s318 = scalar_select %p315, %s316, %s317
    %p321 = pneg %p315
    %p322 = scmp.eq.s32.totalorder %s20, 3
    %p323 = por %p321, %p322
    %p324 = scmp.ne.s32.totalorder %s316, %s319
    %p325 = scmp.eq.s32.totalorder %s20, 0
    %p326 = por %p324, %p325
    %p327 = scmp.ne.s32.totalorder %s316, %s319
    %p328 = scmp.eq.s32.totalorder %s25, 3
    %p329 = por %p327, %p328
    %p330 = scmp.ne.s32.totalorder %s319, %s320
    %p331 = scmp.eq.s32.totalorder %s25, 0
    %p332 = por %p330, %p331
    %p333 = scmp.ne.s32.totalorder %s319, %s320
    %p334 = scmp.eq.s32.totalorder %s26, 3
    %p335 = por %p333, %p334
    %p337 = scmp.ne.s32.totalorder %s320, %s336
    %p338 = scmp.eq.s32.totalorder %s26, 0
    %p339 = por %p337, %p338
    %s340 = ssub.s32 %s27, %s39
    %p341 = scmp.eq.s32.totalorder %s340, 0
    %s343 = sadd.s32 %s342, 1
    %s344 = scalar_select %p341, %s342, %s343
    %p347 = pneg %p341
    %p348 = scmp.eq.s32.totalorder %s20, 3
    %p349 = por %p347, %p348
    %p350 = scmp.ne.s32.totalorder %s342, %s345
    %p351 = scmp.eq.s32.totalorder %s20, 0
    %p352 = por %p350, %p351
    %p353 = scmp.ne.s32.totalorder %s342, %s345
    %p354 = scmp.eq.s32.totalorder %s25, 3
    %p355 = por %p353, %p354
    %p356 = scmp.ne.s32.totalorder %s345, %s346
    %p357 = scmp.eq.s32.totalorder %s25, 0
    %p358 = por %p356, %p357
    %p359 = scmp.ne.s32.totalorder %s345, %s346
    %p360 = scmp.eq.s32.totalorder %s26, 3
    %p361 = por %p359, %p360
    %p363 = scmp.ne.s32.totalorder %s346, %s362
    %p364 = scmp.eq.s32.totalorder %s26, 0
    %p365 = por %p363, %p364
    %s366 = ssub.s32 %s27, %s39
    %p367 = scmp.eq.s32.totalorder %s366, 0
    %s369 = sadd.s32 %s368, 1
    %s370 = scalar_select %p367, %s368, %s369
    %p373 = pneg %p367
    %p374 = scmp.eq.s32.totalorder %s20, 3
    %p375 = por %p373, %p374
    %p376 = scmp.ne.s32.totalorder %s368, %s371
    %p377 = scmp.eq.s32.totalorder %s20, 0
    %p378 = por %p376, %p377
    %p379 = scmp.ne.s32.totalorder %s368, %s371
    %p380 = scmp.eq.s32.totalorder %s25, 3
    %p381 = por %p379, %p380
    %p382 = scmp.ne.s32.totalorder %s371, %s372
    %p383 = scmp.eq.s32.totalorder %s25, 0
    %p384 = por %p382, %p383
    %p385 = scmp.ne.s32.totalorder %s371, %s372
    %p386 = scmp.eq.s32.totalorder %s26, 3
    %p387 = por %p385, %p386
    %p389 = scmp.ne.s32.totalorder %s372, %s388
    %p390 = scmp.eq.s32.totalorder %s26, 0
    %p391 = por %p389, %p390
    %s392 = ssub.s32 %s27, %s39
    %p393 = scmp.eq.s32.totalorder %s392, 0
    %s395 = sadd.s32 %s394, 1
    %s396 = scalar_select %p393, %s394, %s395
    %p399 = pneg %p393
    %p400 = scmp.eq.s32.totalorder %s20, 3
    %p401 = por %p399, %p400
    %p402 = scmp.ne.s32.totalorder %s394, %s397
    %p403 = scmp.eq.s32.totalorder %s20, 0
    %p404 = por %p402, %p403
    %p405 = scmp.ne.s32.totalorder %s394, %s397
    %p406 = scmp.eq.s32.totalorder %s25, 3
    %p407 = por %p405, %p406
    %p408 = scmp.ne.s32.totalorder %s397, %s398
    %p409 = scmp.eq.s32.totalorder %s25, 0
    %p410 = por %p408, %p409
    %p411 = scmp.ne.s32.totalorder %s397, %s398
    %p412 = scmp.eq.s32.totalorder %s26, 3
    %p413 = por %p411, %p412
    %p415 = scmp.ne.s32.totalorder %s398, %s414
    %p416 = scmp.eq.s32.totalorder %s26, 0
    %p417 = por %p415, %p416
    %s418 = ssub.s32 %s27, %s39
    %p419 = scmp.eq.s32.totalorder %s418, 0
    %s421 = sadd.s32 %s420, 1
    %s422 = scalar_select %p419, %s420, %s421
    %p425 = pneg %p419
    %p426 = scmp.eq.s32.totalorder %s20, 3
    %p427 = por %p425, %p426
    %p428 = scmp.ne.s32.totalorder %s420, %s423
    %p429 = scmp.eq.s32.totalorder %s20, 0
    %p430 = por %p428, %p429
    %p431 = scmp.ne.s32.totalorder %s420, %s423
    %p432 = scmp.eq.s32.totalorder %s25, 3
    %p433 = por %p431, %p432
    %p434 = scmp.ne.s32.totalorder %s423, %s424
    %p435 = scmp.eq.s32.totalorder %s25, 0
    %p436 = por %p434, %p435
    %p437 = scmp.ne.s32.totalorder %s423, %s424
    %p438 = scmp.eq.s32.totalorder %s26, 3
    %p439 = por %p437, %p438
    %p441 = scmp.ne.s32.totalorder %s424, %s440
    %p442 = scmp.eq.s32.totalorder %s26, 0
    %p443 = por %p441, %p442
    %p444 = scmp.le.s32.totalorder 1, %s20
    %p445 = scmp.lt.s32.totalorder %s20, 5
    %p446 = pnand %p444, %p445
    %p447 = pneg %p446
    // Predicated region
    $region9: #{_lambda_.1} parent=5 // pred_check
      _
    $region10: #{_lambda_.1} parent=5 // pred_check_branch
      %449 = sbr.rel (%p446) target = $region12
    $region11: #{_lambda_.1} parent=5 // pred_region
      %s450 = ssub.s32 %s20, 1
    $region12: #{_lambda_.1} parent=5 // pred_fallthru
      _
    %p451 = scmp.lt.s32.totalorder %s20, 4
    // Predicated region
    $region13: #{_lambda_.1} parent=5 // pred_check
      %p452 = pneg %p451
    $region14: #{_lambda_.1} parent=5 // pred_check_branch
      %454 = sbr.rel (%p452) target = $region16
    $region15: #{_lambda_.1} parent=5 // pred_region
      // Predicated region
      $region17: #{_lambda_.1} parent=15 // pred_check
        %p455 = pneg %p56
      $region18: #{_lambda_.1} parent=15 // pred_check_branch
        %457 = sbr.rel (%p455) target = $region20
      $region19: #{_lambda_.1} parent=15 // pred_region
        %s458 = smul.u32 %s27, 2
        %s459 = sadd.s32 %s458, %s28
        %s460 = smul.u32 2, %s459
        %p461 = scmp.lt.s32.totalorder %s460, 7
        %s462 = scalar_select %p461, %s460, 7
        %s463 = smul.addr %s462, 2
        %s464 = scalar_lea.vmem %s0, %s463
        %s465 = smul.u32 %s27, 2
        %s466 = sadd.s32 %s465, %s28
        %s467 = smul.u32 2, %s466
      $region20: #{_lambda_.1} parent=15 // pred_fallthru
        _
      // Predicated region
      $region21: #{_lambda_.1} parent=15 // pred_check
        %p468 = pneg %p86
      $region22: #{_lambda_.1} parent=15 // pred_check_branch
        %470 = sbr.rel (%p468) target = $region24
      $region23: #{_lambda_.1} parent=15 // pred_region
        %s471 = smul.u32 %s27, 2
        %s472 = sadd.s32 %s471, %s28
        %s473 = smul.u32 2, %s472
        %p474 = scmp.lt.s32.totalorder %s473, 7
        %s475 = scalar_select %p474, %s473, 7
        %s476 = smul.addr %s475, 2
        %s477 = scalar_lea.vmem %s1, %s476
        %s478 = smul.u32 %s27, 2
        %s479 = sadd.s32 %s478, %s28
        %s480 = smul.u32 2, %s479
      $region24: #{_lambda_.1} parent=15 // pred_fallthru
        _
      // Predicated region
      $region25: #{_lambda_.1} parent=15 // pred_check
        %p481 = pneg %p116
      $region26: #{_lambda_.1} parent=15 // pred_check_branch
        %483 = sbr.rel (%p481) target = $region28
      $region27: #{_lambda_.1} parent=15 // pred_region
        %s484 = smul.u32 %s27, 2
        %s485 = sadd.s32 %s484, %s28
        %s486 = smul.u32 2, %s485
        %p487 = scmp.lt.s32.totalorder %s486, 7
        %s488 = scalar_select %p487, %s486, 7
        %s489 = smul.addr %s488, 2
        %s490 = scalar_lea.vmem %s2, %s489
        %s491 = smul.u32 %s27, 2
        %s492 = sadd.s32 %s491, %s28
        %s493 = smul.u32 2, %s492
      $region28: #{_lambda_.1} parent=15 // pred_fallthru
        _
      // Predicated region
      $region29: #{_lambda_.1} parent=15 // pred_check
        %p494 = pneg %p146
      $region30: #{_lambda_.1} parent=15 // pred_check_branch
        %496 = sbr.rel (%p494) target = $region32
      $region31: #{_lambda_.1} parent=15 // pred_region
        %s497 = smul.u32 %s27, 2
        %s498 = sadd.s32 %s497, %s28
        %s499 = smul.u32 2, %s498
        %p500 = scmp.lt.s32.totalorder %s499, 7
        %s501 = scalar_select %p500, %s499, 7
        %s502 = smul.addr %s501, 2
        %s503 = scalar_lea.vmem %s3, %s502
        %s504 = smul.u32 %s27, 2
        %s505 = sadd.s32 %s504, %s28
        %s506 = smul.u32 2, %s505
      $region32: #{_lambda_.1} parent=15 // pred_fallthru
        _
      // Predicated region
      $region33: #{_lambda_.1} parent=15 // pred_check
        %p507 = pneg %p176
      $region34: #{_lambda_.1} parent=15 // pred_check_branch
        %509 = sbr.rel (%p507) target = $region36
      $region35: #{_lambda_.1} parent=15 // pred_region
        %s510 = smul.u32 %s27, 2
        %s511 = sadd.s32 %s510, %s28
        %s512 = smul.u32 2, %s511
        %p513 = scmp.lt.s32.totalorder %s512, 7
        %s514 = scalar_select %p513, %s512, 7
        %s515 = smul.addr %s514, 2
        %s516 = scalar_lea.vmem %s4, %s515
        %s517 = smul.u32 %s27, 2
        %s518 = sadd.s32 %s517, %s28
        %s519 = smul.u32 2, %s518
      $region36: #{_lambda_.1} parent=15 // pred_fallthru
        _
      // Predicated region
      $region37: #{_lambda_.1} parent=15 // pred_check
        %p520 = pneg %p206
      $region38: #{_lambda_.1} parent=15 // pred_check_branch
        %522 = sbr.rel (%p520) target = $region40
      $region39: #{_lambda_.1} parent=15 // pred_region
        %s523 = smul.u32 %s27, 2
        %s524 = sadd.s32 %s523, %s28
        %s525 = smul.u32 2, %s524
        %p526 = scmp.lt.s32.totalorder %s525, 7
        %s527 = scalar_select %p526, %s525, 7
        %s528 = smul.addr %s527, 2
        %s529 = scalar_lea.vmem %s5, %s528
        %s530 = smul.u32 %s27, 2
        %s531 = sadd.s32 %s530, %s28
        %s532 = smul.u32 2, %s531
      $region40: #{_lambda_.1} parent=15 // pred_fallthru
        _
      // Predicated region
      $region41: #{_lambda_.1} parent=15 // pred_check
        %p533 = pneg %p236
      $region42: #{_lambda_.1} parent=15 // pred_check_branch
        %535 = sbr.rel (%p533) target = $region44
      $region43: #{_lambda_.1} parent=15 // pred_region
        %s536 = smul.u32 %s27, 2
        %s537 = sadd.s32 %s536, %s28
        %s538 = smul.u32 2, %s537
        %p539 = scmp.lt.s32.totalorder %s538, 7
        %s540 = scalar_select %p539, %s538, 7
        %s541 = smul.addr %s540, 2
        %s542 = scalar_lea.vmem %s6, %s541
        %s543 = smul.u32 %s27, 2
        %s544 = sadd.s32 %s543, %s28
        %s545 = smul.u32 2, %s544
      $region44: #{_lambda_.1} parent=15 // pred_fallthru
        _
      // Predicated region
      $region45: #{_lambda_.1} parent=15 // pred_check
        %p546 = pneg %p266
      $region46: #{_lambda_.1} parent=15 // pred_check_branch
        %548 = sbr.rel (%p546) target = $region48
      $region47: #{_lambda_.1} parent=15 // pred_region
        %s549 = smul.u32 %s27, 2
        %s550 = sadd.s32 %s549, %s28
        %s551 = smul.u32 2, %s550
        %p552 = scmp.lt.s32.totalorder %s551, 7
        %s553 = scalar_select %p552, %s551, 7
        %s554 = smul.addr %s553, 2
        %s555 = scalar_lea.vmem %s7, %s554
        %s556 = smul.u32 %s27, 2
        %s557 = sadd.s32 %s556, %s28
        %s558 = smul.u32 2, %s557
      $region48: #{_lambda_.1} parent=15 // pred_fallthru
        _
      // Predicated region
      $region49: #{_lambda_.1} parent=15 // pred_check
        %p559 = pneg %p296
      $region50: #{_lambda_.1} parent=15 // pred_check_branch
        %561 = sbr.rel (%p559) target = $region52
      $region51: #{_lambda_.1} parent=15 // pred_region
        %s562 = smul.u32 %s27, 2
        %s563 = sadd.s32 %s562, %s28
        %s564 = smul.u32 2, %s563
        %p565 = scmp.lt.s32.totalorder %s564, 7
        %s566 = scalar_select %p565, %s564, 7
        %s567 = smul.addr %s566, 2
        %s568 = scalar_lea.vmem %s8, %s567
        %s569 = smul.u32 %s27, 2
        %s570 = sadd.s32 %s569, %s28
        %s571 = smul.u32 2, %s570
      $region52: #{_lambda_.1} parent=15 // pred_fallthru
        _
      // Predicated region
      $region53: #{_lambda_.1} parent=15 // pred_check
        %p572 = pneg %p326
      $region54: #{_lambda_.1} parent=15 // pred_check_branch
        %574 = sbr.rel (%p572) target = $region56
      $region55: #{_lambda_.1} parent=15 // pred_region
        %s575 = smul.u32 %s27, 2
        %s576 = sadd.s32 %s575, %s28
        %s577 = smul.u32 2, %s576
        %p578 = scmp.lt.s32.totalorder %s577, 7
        %s579 = scalar_select %p578, %s577, 7
        %s580 = smul.addr %s579, 2
        %s581 = scalar_lea.vmem %s9, %s580
        %s582 = smul.u32 %s27, 2
        %s583 = sadd.s32 %s582, %s28
        %s584 = smul.u32 2, %s583
      $region56: #{_lambda_.1} parent=15 // pred_fallthru
        _
    $region16: #{_lambda_.1} parent=5 // pred_fallthru
      _
    %p585 = scmp.le.s32.totalorder 1, %s20
    %p586 = scmp.lt.s32.totalorder %s20, 5
    %p587 = pnand %p585, %p586
    %p588 = pneg %p587
    // Predicated region
    $region57: #{_lambda_.1} parent=5 // pred_check
      _
    $region58: #{_lambda_.1} parent=5 // pred_check_branch
      %590 = sbr.rel (%p587) target = $region60
    $region59: #{_lambda_.1} parent=5 // pred_region
      %s591 = ssub.s32 %s20, 1
      %s592 = smul.u32 %s29, 2
      %s593 = sadd.s32 %s592, %s30
      %s594 = smul.u32 2, %s593
      %p595 = scmp.lt.s32.totalorder %s594, 7
      %s596 = scalar_select %p595, %s594, 7
      %s597 = smul.addr %s596, 2
      %s598 = scalar_lea.vmem %s0, %s597
      %p599 = pneg %p62
      %p600 = pneg %p59
      %s601 = smul.u32 %s29, 2
      %s602 = sadd.s32 %s601, %s30
      %s603 = smul.u32 2, %s602
      %p604 = scmp.lt.s32.totalorder %s603, 7
      %s605 = scalar_select %p604, %s603, 7
      %s606 = smul.addr %s605, 2
      %s607 = scalar_lea.vmem %s1, %s606
      %p608 = pneg %p92
      %p609 = pneg %p89
      %s610 = smul.u32 %s29, 2
      %s611 = sadd.s32 %s610, %s30
      %s612 = smul.u32 2, %s611
      %p613 = scmp.lt.s32.totalorder %s612, 7
      %s614 = scalar_select %p613, %s612, 7
      %s615 = smul.addr %s614, 2
      %s616 = scalar_lea.vmem %s2, %s615
      %p617 = pneg %p122
      %p618 = pneg %p119
      %s619 = smul.u32 %s29, 2
      %s620 = sadd.s32 %s619, %s30
      %s621 = smul.u32 2, %s620
      %p622 = scmp.lt.s32.totalorder %s621, 7
      %s623 = scalar_select %p622, %s621, 7
      %s624 = smul.addr %s623, 2
      %s625 = scalar_lea.vmem %s3, %s624
      %p626 = pneg %p152
      %p627 = pneg %p149
      %s628 = smul.u32 %s29, 2
      %s629 = sadd.s32 %s628, %s30
      %s630 = smul.u32 2, %s629
      %p631 = scmp.lt.s32.totalorder %s630, 7
      %s632 = scalar_select %p631, %s630, 7
      %s633 = smul.addr %s632, 2
      %s634 = scalar_lea.vmem %s4, %s633
      %p635 = pneg %p182
      %p636 = pneg %p179
      %s637 = smul.u32 %s29, 2
      %s638 = sadd.s32 %s637, %s30
      %s639 = smul.u32 2, %s638
      %p640 = scmp.lt.s32.totalorder %s639, 7
      %s641 = scalar_select %p640, %s639, 7
      %s642 = smul.addr %s641, 2
      %s643 = scalar_lea.vmem %s5, %s642
      %p644 = pneg %p212
      %p645 = pneg %p209
      %s646 = smul.u32 %s29, 2
      %s647 = sadd.s32 %s646, %s30
      %s648 = smul.u32 2, %s647
      %p649 = scmp.lt.s32.totalorder %s648, 7
      %s650 = scalar_select %p649, %s648, 7
      %s651 = smul.addr %s650, 2
      %s652 = scalar_lea.vmem %s6, %s651
      %p653 = pneg %p242
      %p654 = pneg %p239
      %s655 = smul.u32 %s29, 2
      %s656 = sadd.s32 %s655, %s30
      %s657 = smul.u32 2, %s656
      %p658 = scmp.lt.s32.totalorder %s657, 7
      %s659 = scalar_select %p658, %s657, 7
      %s660 = smul.addr %s659, 2
      %s661 = scalar_lea.vmem %s7, %s660
      %p662 = pneg %p272
      %p663 = pneg %p269
      %s664 = smul.u32 %s29, 2
      %s665 = sadd.s32 %s664, %s30
      %s666 = smul.u32 2, %s665
      %p667 = scmp.lt.s32.totalorder %s666, 7
      %s668 = scalar_select %p667, %s666, 7
      %s669 = smul.addr %s668, 2
      %s670 = scalar_lea.vmem %s8, %s669
      %p671 = pneg %p302
      %p672 = pneg %p299
      %s673 = smul.u32 %s29, 2
      %s674 = sadd.s32 %s673, %s30
      %s675 = smul.u32 2, %s674
      %p676 = scmp.lt.s32.totalorder %s675, 7
      %s677 = scalar_select %p676, %s675, 7
      %s678 = smul.addr %s677, 2
      %s679 = scalar_lea.vmem %s9, %s678
      %p680 = pneg %p332
      %p681 = pneg %p329
      %p682 = pneg %p358
      %p683 = pneg %p355
      %p684 = scmp.lt.s32.totalorder %s29, 1
      %s685 = scalar_select %p684, %s29, 1
      %s686 = smul.addr %s685, 9
      %s687 = scalar_lea.vmem %s10, %s686
      %p688 = pneg %p384
      %p689 = pneg %p381
      %p690 = scmp.lt.s32.totalorder %s29, 1
      %s691 = scalar_select %p690, %s29, 1
      %s692 = smul.addr %s691, 9
      %s693 = smul.addr %s692, 2
      %s694 = scalar_lea.vmem %s11, %s693
      %p695 = pneg %p410
      %p696 = pneg %p407
      %p697 = scmp.lt.s32.totalorder %s29, 1
      %s698 = scalar_select %p697, %s29, 1
      %s699 = smul.addr %s698, 9
      %s700 = smul.addr %s699, 2
      %s701 = scalar_lea.vmem %s12, %s700
      %p702 = pneg %p436
      %p703 = pneg %p433
      %p704 = scmp.lt.s32.totalorder %s29, 1
      %s705 = scalar_select %p704, %s29, 1
      %s706 = smul.addr %s705, 2
      %s707 = scalar_lea.vmem %s13, %s706
      %s708 = smul.u32 %s29, 2
      %s709 = sadd.s32 %s708, %s30
      %s710 = smul.u32 2, %s709
      %p711 = scmp.lt.s32.totalorder %s710, 7
      %s712 = scalar_select %p711, %s710, 7
      %s713 = smul.addr %s712, 2
      %s714 = scalar_lea.vmem %s0, %s713
      %s715 = smul.u32 %s29, 2
      %s716 = sadd.s32 %s715, %s30
      %s717 = smul.u32 2, %s716
      %s718 = smul.u32 %s29, 2
      %s719 = sadd.s32 %s718, %s30
      %s720 = smul.u32 2, %s719
      %p721 = scmp.lt.s32.totalorder %s720, 7
      %s722 = scalar_select %p721, %s720, 7
      %s723 = smul.addr %s722, 2
      %s724 = scalar_lea.vmem %s1, %s723
      %s725 = smul.u32 %s29, 2
      %s726 = sadd.s32 %s725, %s30
      %s727 = smul.u32 2, %s726
      %s728 = smul.u32 %s29, 2
      %s729 = sadd.s32 %s728, %s30
      %s730 = smul.u32 2, %s729
      %p731 = scmp.lt.s32.totalorder %s730, 7
      %s732 = scalar_select %p731, %s730, 7
      %s733 = smul.addr %s732, 2
      %s734 = scalar_lea.vmem %s2, %s733
      %s735 = smul.u32 %s29, 2
      %s736 = sadd.s32 %s735, %s30
      %s737 = smul.u32 2, %s736
      %s738 = smul.u32 %s29, 2
      %s739 = sadd.s32 %s738, %s30
      %s740 = smul.u32 2, %s739
      %p741 = scmp.lt.s32.totalorder %s740, 7
      %s742 = scalar_select %p741, %s740, 7
      %s743 = smul.addr %s742, 2
      %s744 = scalar_lea.vmem %s3, %s743
      %s745 = smul.u32 %s29, 2
      %s746 = sadd.s32 %s745, %s30
      %s747 = smul.u32 2, %s746
      %s748 = smul.u32 %s29, 2
      %s749 = sadd.s32 %s748, %s30
      %s750 = smul.u32 2, %s749
      %p751 = scmp.lt.s32.totalorder %s750, 7
      %s752 = scalar_select %p751, %s750, 7
      %s753 = smul.addr %s752, 2
      %s754 = scalar_lea.vmem %s4, %s753
      %s755 = smul.u32 %s29, 2
      %s756 = sadd.s32 %s755, %s30
      %s757 = smul.u32 2, %s756
      %s758 = smul.u32 %s29, 2
      %s759 = sadd.s32 %s758, %s30
      %s760 = smul.u32 2, %s759
      %p761 = scmp.lt.s32.totalorder %s760, 7
      %s762 = scalar_select %p761, %s760, 7
      %s763 = smul.addr %s762, 2
      %s764 = scalar_lea.vmem %s5, %s763
      %s765 = smul.u32 %s29, 2
      %s766 = sadd.s32 %s765, %s30
      %s767 = smul.u32 2, %s766
      %s768 = smul.u32 %s29, 2
      %s769 = sadd.s32 %s768, %s30
      %s770 = smul.u32 2, %s769
      %p771 = scmp.lt.s32.totalorder %s770, 7
      %s772 = scalar_select %p771, %s770, 7
      %s773 = smul.addr %s772, 2
      %s774 = scalar_lea.vmem %s6, %s773
      %s775 = smul.u32 %s29, 2
      %s776 = sadd.s32 %s775, %s30
      %s777 = smul.u32 2, %s776
      %s778 = smul.u32 %s29, 2
      %s779 = sadd.s32 %s778, %s30
      %s780 = smul.u32 2, %s779
      %p781 = scmp.lt.s32.totalorder %s780, 7
      %s782 = scalar_select %p781, %s780, 7
      %s783 = smul.addr %s782, 2
      %s784 = scalar_lea.vmem %s7, %s783
      %s785 = smul.u32 %s29, 2
      %s786 = sadd.s32 %s785, %s30
      %s787 = smul.u32 2, %s786
      %s788 = smul.u32 %s29, 2
      %s789 = sadd.s32 %s788, %s30
      %s790 = smul.u32 2, %s789
      %p791 = scmp.lt.s32.totalorder %s790, 7
      %s792 = scalar_select %p791, %s790, 7
      %s793 = smul.addr %s792, 2
      %s794 = scalar_lea.vmem %s8, %s793
      %s795 = smul.u32 %s29, 2
      %s796 = sadd.s32 %s795, %s30
      %s797 = smul.u32 2, %s796
      %s798 = smul.u32 %s29, 2
      %s799 = sadd.s32 %s798, %s30
      %s800 = smul.u32 2, %s799
      %p801 = scmp.lt.s32.totalorder %s800, 7
      %s802 = scalar_select %p801, %s800, 7
      %s803 = smul.addr %s802, 2
      %s804 = scalar_lea.vmem %s9, %s803
      %s805 = smul.u32 %s29, 2
      %s806 = sadd.s32 %s805, %s30
      %s807 = smul.u32 2, %s806
      %p808 = scmp.lt.s32.totalorder %s29, 1
      %s809 = scalar_select %p808, %s29, 1
      %s810 = smul.addr %s809, 9
      %s811 = scalar_lea.vmem %s10, %s810
      %p812 = scmp.lt.s32.totalorder %s29, 1
      %s813 = scalar_select %p812, %s29, 1
      %s814 = smul.addr %s813, 9
      %s815 = smul.addr %s814, 2
      %s816 = scalar_lea.vmem %s11, %s815
      %p817 = scmp.lt.s32.totalorder %s29, 1
      %s818 = scalar_select %p817, %s29, 1
      %s819 = smul.addr %s818, 9
      %s820 = smul.addr %s819, 2
      %s821 = scalar_lea.vmem %s12, %s820
      %p822 = scmp.lt.s32.totalorder %s29, 1
      %s823 = scalar_select %p822, %s29, 1
      %s824 = smul.addr %s823, 2
      %s825 = scalar_lea.vmem %s13, %s824
      %p826 = scmp.eq.s32.totalorder %s30, 0
      // Predicated region
      $region61: #{_lambda_.1} parent=59 // pred_check
        %p827 = pneg %p826
      $region62: #{_lambda_.1} parent=59 // pred_check_branch
        %829 = sbr.rel (%p827) target = $region64
      $region63: #{_lambda_.1} parent=59 // pred_region
        %vm830 = vcmask 0
        %831 = vst.msk [vmem:[%s811] sm:$0x1] %vm830, 0.0
        %832 = vst.msk [vmem:[%s811 + $0x1] sm:$0x1] %vm830, 0.0
        %833 = vst.msk [vmem:[%s811 + $0x2] sm:$0x1] %vm830, 0.0
        %834 = vst.msk [vmem:[%s811 + $0x3] sm:$0x1] %vm830, 0.0
        %835 = vst.msk [vmem:[%s811 + $0x4] sm:$0x1] %vm830, 0.0
        %836 = vst.msk [vmem:[%s811 + $0x5] sm:$0x1] %vm830, 0.0
        %837 = vst.msk [vmem:[%s811 + $0x6] sm:$0x1] %vm830, 0.0
        %838 = vst.msk [vmem:[%s811 + $0x7] sm:$0x1] %vm830, 0.0
        %839 = vst.msk [vmem:[%s811 + $0x8] sm:$0x1] %vm830, 0.0
        %vm840 = vcmask 1024
        %841 = vst.msk [vmem:[%s816] sm:$0x3] %vm840, 0.0
        %842 = vst.msk [vmem:[%s816 + $0x2] sm:$0x3] %vm840, 0.0
        %843 = vst.msk [vmem:[%s816 + $0x4] sm:$0x3] %vm840, 0.0
        %844 = vst.msk [vmem:[%s816 + $0x6] sm:$0x3] %vm840, 0.0
        %845 = vst.msk [vmem:[%s816 + $0x8] sm:$0x3] %vm840, 0.0
        %846 = vst.msk [vmem:[%s816 + $0xa] sm:$0x3] %vm840, 0.0
        %847 = vst.msk [vmem:[%s816 + $0xc] sm:$0x3] %vm840, 0.0
        %848 = vst.msk [vmem:[%s816 + $0xe] sm:$0x3] %vm840, 0.0
        %849 = vst.msk [vmem:[%s816 + $0x10] sm:$0x3] %vm840, 0.0
        %850 = vst.msk [vmem:[%s821] sm:$0x3] %vm840, 0.0
        %851 = vst.msk [vmem:[%s821 + $0x2] sm:$0x3] %vm840, 0.0
        %852 = vst.msk [vmem:[%s821 + $0x4] sm:$0x3] %vm840, 0.0
        %853 = vst.msk [vmem:[%s821 + $0x6] sm:$0x3] %vm840, 0.0
        %854 = vst.msk [vmem:[%s821 + $0x8] sm:$0x3] %vm840, 0.0
        %855 = vst.msk [vmem:[%s821 + $0xa] sm:$0x3] %vm840, 0.0
        %856 = vst.msk [vmem:[%s821 + $0xc] sm:$0x3] %vm840, 0.0
        %857 = vst.msk [vmem:[%s821 + $0xe] sm:$0x3] %vm840, 0.0
        %858 = vst.msk [vmem:[%s821 + $0x10] sm:$0x3] %vm840, 0.0
        %859 = vst.msk [vmem:[%s825] sm:$0x3] %vm840, 0.0
      $region64: #{_lambda_.1} parent=59 // pred_fallthru
        _
      %v860 = vld [vmem:[%s714] sm:$0xf]
      %v861 = vmax.f32 %v860, 1e-09
      %v862 = vmin.f32 %v861, 1.0
      %v863 = vsub.f32 1.0, %v862
      %v864 = vld [vmem:[%s825] sm:$0x3]
      %v867 = vunpack.c.l.s4 1983009808
      %v868 = vunpack.c.0.s8 %v867
      %v869 = vlaneseq
      %v870 = vshrl.u32 %v869, 7
      %v871 = vsub.s32 %v868, %v870
      %v872 = vrot.slane %v862, %v871
      %v873 = vcombine.high %v872, %v872
      %vm876 = vcmask 1041408
      %v877 = vsel %vm876, %v872, 0.0
      %v878 = vsel %vm876, %v873, 0.0
      %v879 = vadd.f32 %v877, %v878
      %880 = vadd.xlane.f32.xlu0 %v879
      %v881 = vpop.xlane.xlu0 %880
      %v882 = vadd.f32 %v864, %v881
      %vm883 = vcmask 1024
      %884 = vst.msk [vmem:[%s825] sm:$0x3] %vm883, %v882
      %v885 = vld [vmem:[%s724] sm:$0xf]
      %v886 = vsub.f32 0.0, %v885
      %v887 = vmul.f32 %v886, 1.442695
      %v888 = vpow.pop %v887
      %v889 = vadd.f32 %v888, 1.0
      %v890 = vrcp.pop %v889
      %v891 = vmul.f32 1.0, %v890
      %v892 = vlog2.pop %v889
      %v893 = vmul.f32 %v892, 0.6931472
      %v894 = vsub.f32 0.0, %v893
      %v895 = vmax.f32 %v894, -100.0
      %v896 = vsub.f32 1.0, %v891
      %v897 = vlog2.pop %v896
      %v898 = vmul.f32 %v897, 0.6931472
      %v899 = vmax.f32 %v898, -100.0
      %v900 = vmul.f32 %v862, %v895
      %v901 = vmul.f32 %v863, %v899
      %v902 = vadd.f32 %v900, %v901
      %v903 = vmul.f32 %v891, %v862
      %v904 = vld [vmem:[%s811] sm:$0x1]
      %v907 = vunpack.c.l.s4 1983009808
      %v908 = vunpack.c.0.s8 %v907
      %v909 = vlaneseq
      %v910 = vshrl.u32 %v909, 7
      %v911 = vsub.s32 %v908, %v910
      %v912 = vrot.slane %v902, %v911
      %v913 = vcombine.high %v912, %v912
      %v916 = vsel %vm876, %v912, 0.0
      %v917 = vsel %vm876, %v913, 0.0
      %v918 = vadd.f32 %v916, %v917
      %919 = vadd.xlane.f32.xlu0 %v918
      %v920 = vpop.xlane.xlu0 %919
      %v921 = vrot.slane %v920, 4
      %v922 = vadd.f32 %v920, %v921
      %v923 = vrot.slane %v922, 2
      %v924 = vadd.f32 %v922, %v923
      %v925 = vrot.slane %v924, 1
      %v926 = vadd.f32 %v924, %v925
      %s927 = vtos %v926
      %v928 = vstv %s927
      %v929 = vadd.f32 %v904, %v928
      %vm930 = vcmask 0
      %931 = vst.msk [vmem:[%s811] sm:$0x1] %vm930, %v929
      %v932 = vld [vmem:[%s816] sm:$0x3]
      %v935 = vunpack.c.l.s4 1983009808
      %v936 = vunpack.c.0.s8 %v935
      %v937 = vlaneseq
      %v938 = vshrl.u32 %v937, 7
      %v939 = vsub.s32 %v936, %v938
      %v940 = vrot.slane %v903, %v939
      %v941 = vcombine.high %v940, %v940
      %v944 = vsel %vm876, %v940, 0.0
      %v945 = vsel %vm876, %v941, 0.0
      %v946 = vadd.f32 %v944, %v945
      %947 = vadd.xlane.f32.xlu0 %v946
      %v948 = vpop.xlane.xlu0 %947
      %v949 = vadd.f32 %v932, %v948
      %950 = vst.msk [vmem:[%s816] sm:$0x3] %vm883, %v949
      %v951 = vld [vmem:[%s821] sm:$0x3]
      %v954 = vunpack.c.l.s4 1983009808
      %v955 = vunpack.c.0.s8 %v954
      %v956 = vlaneseq
      %v957 = vshrl.u32 %v956, 7
      %v958 = vsub.s32 %v955, %v957
      %v959 = vrot.slane %v891, %v958
      %v960 = vcombine.high %v959, %v959
      %v963 = vsel %vm876, %v959, 0.0
      %v964 = vsel %vm876, %v960, 0.0
      %v965 = vadd.f32 %v963, %v964
      %966 = vadd.xlane.f32.xlu0 %v965
      %v967 = vpop.xlane.xlu0 %966
      %v968 = vadd.f32 %v951, %v967
      %969 = vst.msk [vmem:[%s821] sm:$0x3] %vm883, %v968
      %v970 = vld [vmem:[%s734] sm:$0xf]
      %v971 = vsub.f32 0.0, %v970
      %v972 = vmul.f32 %v971, 1.442695
      %v973 = vpow.pop %v972
      %v974 = vadd.f32 %v973, 1.0
      %v975 = vrcp.pop %v974
      %v976 = vmul.f32 1.0, %v975
      %v977 = vlog2.pop %v974
      %v978 = vmul.f32 %v977, 0.6931472
      %v979 = vsub.f32 0.0, %v978
      %v980 = vmax.f32 %v979, -100.0
      %v981 = vsub.f32 1.0, %v976
      %v982 = vlog2.pop %v981
      %v983 = vmul.f32 %v982, 0.6931472
      %v984 = vmax.f32 %v983, -100.0
      %v985 = vmul.f32 %v862, %v980
      %v986 = vmul.f32 %v863, %v984
      %v987 = vadd.f32 %v985, %v986
      %v988 = vmul.f32 %v976, %v862
      %s989 = scalar_lea.vmem %s811, 1
      %v990 = vld [vmem:[%s989] sm:$0x1]
      %v993 = vunpack.c.l.s4 1983009808
      %v994 = vunpack.c.0.s8 %v993
      %v995 = vlaneseq
      %v996 = vshrl.u32 %v995, 7
      %v997 = vsub.s32 %v994, %v996
      %v998 = vrot.slane %v987, %v997
      %v999 = vcombine.high %v998, %v998
      %v1002 = vsel %vm876, %v998, 0.0
      %v1003 = vsel %vm876, %v999, 0.0
      %v1004 = vadd.f32 %v1002, %v1003
      %1005 = vadd.xlane.f32.xlu0 %v1004
      %v1006 = vpop.xlane.xlu0 %1005
      %v1007 = vrot.slane %v1006, 4
      %v1008 = vadd.f32 %v1006, %v1007
      %v1009 = vrot.slane %v1008, 2
      %v1010 = vadd.f32 %v1008, %v1009
      %v1011 = vrot.slane %v1010, 1
      %v1012 = vadd.f32 %v1010, %v1011
      %s1013 = vtos %v1012
      %v1014 = vstv %s1013
      %v1015 = vadd.f32 %v990, %v1014
      %1016 = vst.msk [vmem:[%s989] sm:$0x1] %vm930, %v1015
      %s1017 = scalar_lea.vmem %s816, 2
      %v1018 = vld [vmem:[%s1017] sm:$0x3]
      %v1021 = vunpack.c.l.s4 1983009808
      %v1022 = vunpack.c.0.s8 %v1021
      %v1023 = vlaneseq
      %v1024 = vshrl.u32 %v1023, 7
      %v1025 = vsub.s32 %v1022, %v1024
      %v1026 = vrot.slane %v988, %v1025
      %v1027 = vcombine.high %v1026, %v1026
      %v1030 = vsel %vm876, %v1026, 0.0
      %v1031 = vsel %vm876, %v1027, 0.0
      %v1032 = vadd.f32 %v1030, %v1031
      %1033 = vadd.xlane.f32.xlu0 %v1032
      %v1034 = vpop.xlane.xlu0 %1033
      %v1035 = vadd.f32 %v1018, %v1034
      %1036 = vst.msk [vmem:[%s1017] sm:$0x3] %vm883, %v1035
      %s1037 = scalar_lea.vmem %s821, 2
      %v1038 = vld [vmem:[%s1037] sm:$0x3]
      %v1041 = vunpack.c.l.s4 1983009808
      %v1042 = vunpack.c.0.s8 %v1041
      %v1043 = vlaneseq
      %v1044 = vshrl.u32 %v1043, 7
      %v1045 = vsub.s32 %v1042, %v1044
      %v1046 = vrot.slane %v976, %v1045
      %v1047 = vcombine.high %v1046, %v1046
      %v1050 = vsel %vm876, %v1046, 0.0
      %v1051 = vsel %vm876, %v1047, 0.0
      %v1052 = vadd.f32 %v1050, %v1051
      %1053 = vadd.xlane.f32.xlu0 %v1052
      %v1054 = vpop.xlane.xlu0 %1053
      %v1055 = vadd.f32 %v1038, %v1054
      %1056 = vst.msk [vmem:[%s1037] sm:$0x3] %vm883, %v1055
      %v1057 = vld [vmem:[%s744] sm:$0xf]
      %v1058 = vsub.f32 0.0, %v1057
      %v1059 = vmul.f32 %v1058, 1.442695
      %v1060 = vpow.pop %v1059
      %v1061 = vadd.f32 %v1060, 1.0
      %v1062 = vrcp.pop %v1061
      %v1063 = vmul.f32 1.0, %v1062
      %v1064 = vlog2.pop %v1061
      %v1065 = vmul.f32 %v1064, 0.6931472
      %v1066 = vsub.f32 0.0, %v1065
      %v1067 = vmax.f32 %v1066, -100.0
      %v1068 = vsub.f32 1.0, %v1063
      %v1069 = vlog2.pop %v1068
      %v1070 = vmul.f32 %v1069, 0.6931472
      %v1071 = vmax.f32 %v1070, -100.0
      %v1072 = vmul.f32 %v862, %v1067
      %v1073 = vmul.f32 %v863, %v1071
      %v1074 = vadd.f32 %v1072, %v1073
      %v1075 = vmul.f32 %v1063, %v862
      %s1076 = scalar_lea.vmem %s811, 2
      %v1077 = vld [vmem:[%s1076] sm:$0x1]
      %v1080 = vunpack.c.l.s4 1983009808
      %v1081 = vunpack.c.0.s8 %v1080
      %v1082 = vlaneseq
      %v1083 = vshrl.u32 %v1082, 7
      %v1084 = vsub.s32 %v1081, %v1083
      %v1085 = vrot.slane %v1074, %v1084
      %v1086 = vcombine.high %v1085, %v1085
      %v1089 = vsel %vm876, %v1085, 0.0
      %v1090 = vsel %vm876, %v1086, 0.0
      %v1091 = vadd.f32 %v1089, %v1090
      %1092 = vadd.xlane.f32.xlu0 %v1091
      %v1093 = vpop.xlane.xlu0 %1092
      %v1094 = vrot.slane %v1093, 4
      %v1095 = vadd.f32 %v1093, %v1094
      %v1096 = vrot.slane %v1095, 2
      %v1097 = vadd.f32 %v1095, %v1096
      %v1098 = vrot.slane %v1097, 1
      %v1099 = vadd.f32 %v1097, %v1098
      %s1100 = vtos %v1099
      %v1101 = vstv %s1100
      %v1102 = vadd.f32 %v1077, %v1101
      %1103 = vst.msk [vmem:[%s1076] sm:$0x1] %vm930, %v1102
      %s1104 = scalar_lea.vmem %s816, 4
      %v1105 = vld [vmem:[%s1104] sm:$0x3]
      %v1108 = vunpack.c.l.s4 1983009808
      %v1109 = vunpack.c.0.s8 %v1108
      %v1110 = vlaneseq
      %v1111 = vshrl.u32 %v1110, 7
      %v1112 = vsub.s32 %v1109, %v1111
      %v1113 = vrot.slane %v1075, %v1112
      %v1114 = vcombine.high %v1113, %v1113
      %v1117 = vsel %vm876, %v1113, 0.0
      %v1118 = vsel %vm876, %v1114, 0.0
      %v1119 = vadd.f32 %v1117, %v1118
      %1120 = vadd.xlane.f32.xlu0 %v1119
      %v1121 = vpop.xlane.xlu0 %1120
      %v1122 = vadd.f32 %v1105, %v1121
      %1123 = vst.msk [vmem:[%s1104] sm:$0x3] %vm883, %v1122
      %s1124 = scalar_lea.vmem %s821, 4
      %v1125 = vld [vmem:[%s1124] sm:$0x3]
      %v1128 = vunpack.c.l.s4 1983009808
      %v1129 = vunpack.c.0.s8 %v1128
      %v1130 = vlaneseq
      %v1131 = vshrl.u32 %v1130, 7
      %v1132 = vsub.s32 %v1129, %v1131
      %v1133 = vrot.slane %v1063, %v1132
      %v1134 = vcombine.high %v1133, %v1133
      %v1137 = vsel %vm876, %v1133, 0.0
      %v1138 = vsel %vm876, %v1134, 0.0
      %v1139 = vadd.f32 %v1137, %v1138
      %1140 = vadd.xlane.f32.xlu0 %v1139
      %v1141 = vpop.xlane.xlu0 %1140
      %v1142 = vadd.f32 %v1125, %v1141
      %1143 = vst.msk [vmem:[%s1124] sm:$0x3] %vm883, %v1142
      %v1144 = vld [vmem:[%s754] sm:$0xf]
      %v1145 = vsub.f32 0.0, %v1144
      %v1146 = vmul.f32 %v1145, 1.442695
      %v1147 = vpow.pop %v1146
      %v1148 = vadd.f32 %v1147, 1.0
      %v1149 = vrcp.pop %v1148
      %v1150 = vmul.f32 1.0, %v1149
      %v1151 = vlog2.pop %v1148
      %v1152 = vmul.f32 %v1151, 0.6931472
      %v1153 = vsub.f32 0.0, %v1152
      %v1154 = vmax.f32 %v1153, -100.0
      %v1155 = vsub.f32 1.0, %v1150
      %v1156 = vlog2.pop %v1155
      %v1157 = vmul.f32 %v1156, 0.6931472
      %v1158 = vmax.f32 %v1157, -100.0
      %v1159 = vmul.f32 %v862, %v1154
      %v1160 = vmul.f32 %v863, %v1158
      %v1161 = vadd.f32 %v1159, %v1160
      %v1162 = vmul.f32 %v1150, %v862
      %s1163 = scalar_lea.vmem %s811, 3
      %v1164 = vld [vmem:[%s1163] sm:$0x1]
      %v1167 = vunpack.c.l.s4 1983009808
      %v1168 = vunpack.c.0.s8 %v1167
      %v1169 = vlaneseq
      %v1170 = vshrl.u32 %v1169, 7
      %v1171 = vsub.s32 %v1168, %v1170
      %v1172 = vrot.slane %v1161, %v1171
      %v1173 = vcombine.high %v1172, %v1172
      %v1176 = vsel %vm876, %v1172, 0.0
      %v1177 = vsel %vm876, %v1173, 0.0
      %v1178 = vadd.f32 %v1176, %v1177
      %1179 = vadd.xlane.f32.xlu0 %v1178
      %v1180 = vpop.xlane.xlu0 %1179
      %v1181 = vrot.slane %v1180, 4
      %v1182 = vadd.f32 %v1180, %v1181
      %v1183 = vrot.slane %v1182, 2
      %v1184 = vadd.f32 %v1182, %v1183
      %v1185 = vrot.slane %v1184, 1
      %v1186 = vadd.f32 %v1184, %v1185
      %s1187 = vtos %v1186
      %v1188 = vstv %s1187
      %v1189 = vadd.f32 %v1164, %v1188
      %1190 = vst.msk [vmem:[%s1163] sm:$0x1] %vm930, %v1189
      %s1191 = scalar_lea.vmem %s816, 6
      %v1192 = vld [vmem:[%s1191] sm:$0x3]
      %v1195 = vunpack.c.l.s4 1983009808
      %v1196 = vunpack.c.0.s8 %v1195
      %v1197 = vlaneseq
      %v1198 = vshrl.u32 %v1197, 7
      %v1199 = vsub.s32 %v1196, %v1198
      %v1200 = vrot.slane %v1162, %v1199
      %v1201 = vcombine.high %v1200, %v1200
      %v1204 = vsel %vm876, %v1200, 0.0
      %v1205 = vsel %vm876, %v1201, 0.0
      %v1206 = vadd.f32 %v1204, %v1205
      %1207 = vadd.xlane.f32.xlu0 %v1206
      %v1208 = vpop.xlane.xlu0 %1207
      %v1209 = vadd.f32 %v1192, %v1208
      %1210 = vst.msk [vmem:[%s1191] sm:$0x3] %vm883, %v1209
      %s1211 = scalar_lea.vmem %s821, 6
      %v1212 = vld [vmem:[%s1211] sm:$0x3]
      %v1215 = vunpack.c.l.s4 1983009808
      %v1216 = vunpack.c.0.s8 %v1215
      %v1217 = vlaneseq
      %v1218 = vshrl.u32 %v1217, 7
      %v1219 = vsub.s32 %v1216, %v1218
      %v1220 = vrot.slane %v1150, %v1219
      %v1221 = vcombine.high %v1220, %v1220
      %v1224 = vsel %vm876, %v1220, 0.0
      %v1225 = vsel %vm876, %v1221, 0.0
      %v1226 = vadd.f32 %v1224, %v1225
      %1227 = vadd.xlane.f32.xlu0 %v1226
      %v1228 = vpop.xlane.xlu0 %1227
      %v1229 = vadd.f32 %v1212, %v1228
      %1230 = vst.msk [vmem:[%s1211] sm:$0x3] %vm883, %v1229
      %v1231 = vld [vmem:[%s764] sm:$0xf]
      %v1232 = vsub.f32 0.0, %v1231
      %v1233 = vmul.f32 %v1232, 1.442695
      %v1234 = vpow.pop %v1233
      %v1235 = vadd.f32 %v1234, 1.0
      %v1236 = vrcp.pop %v1235
      %v1237 = vmul.f32 1.0, %v1236
      %v1238 = vlog2.pop %v1235
      %v1239 = vmul.f32 %v1238, 0.6931472
      %v1240 = vsub.f32 0.0, %v1239
      %v1241 = vmax.f32 %v1240, -100.0
      %v1242 = vsub.f32 1.0, %v1237
      %v1243 = vlog2.pop %v1242
      %v1244 = vmul.f32 %v1243, 0.6931472
      %v1245 = vmax.f32 %v1244, -100.0
      %v1246 = vmul.f32 %v862, %v1241
      %v1247 = vmul.f32 %v863, %v1245
      %v1248 = vadd.f32 %v1246, %v1247
      %v1249 = vmul.f32 %v1237, %v862
      %s1250 = scalar_lea.vmem %s811, 4
      %v1251 = vld [vmem:[%s1250] sm:$0x1]
      %v1254 = vunpack.c.l.s4 1983009808
      %v1255 = vunpack.c.0.s8 %v1254
      %v1256 = vlaneseq
      %v1257 = vshrl.u32 %v1256, 7
      %v1258 = vsub.s32 %v1255, %v1257
      %v1259 = vrot.slane %v1248, %v1258
      %v1260 = vcombine.high %v1259, %v1259
      %v1263 = vsel %vm876, %v1259, 0.0
      %v1264 = vsel %vm876, %v1260, 0.0
      %v1265 = vadd.f32 %v1263, %v1264
      %1266 = vadd.xlane.f32.xlu0 %v1265
      %v1267 = vpop.xlane.xlu0 %1266
      %v1268 = vrot.slane %v1267, 4
      %v1269 = vadd.f32 %v1267, %v1268
      %v1270 = vrot.slane %v1269, 2
      %v1271 = vadd.f32 %v1269, %v1270
      %v1272 = vrot.slane %v1271, 1
      %v1273 = vadd.f32 %v1271, %v1272
      %s1274 = vtos %v1273
      %v1275 = vstv %s1274
      %v1276 = vadd.f32 %v1251, %v1275
      %1277 = vst.msk [vmem:[%s1250] sm:$0x1] %vm930, %v1276
      %s1278 = scalar_lea.vmem %s816, 8
      %v1279 = vld [vmem:[%s1278] sm:$0x3]
      %v1282 = vunpack.c.l.s4 1983009808
      %v1283 = vunpack.c.0.s8 %v1282
      %v1284 = vlaneseq
      %v1285 = vshrl.u32 %v1284, 7
      %v1286 = vsub.s32 %v1283, %v1285
      %v1287 = vrot.slane %v1249, %v1286
      %v1288 = vcombine.high %v1287, %v1287
      %v1291 = vsel %vm876, %v1287, 0.0
      %v1292 = vsel %vm876, %v1288, 0.0
      %v1293 = vadd.f32 %v1291, %v1292
      %1294 = vadd.xlane.f32.xlu0 %v1293
      %v1295 = vpop.xlane.xlu0 %1294
      %v1296 = vadd.f32 %v1279, %v1295
      %1297 = vst.msk [vmem:[%s1278] sm:$0x3] %vm883, %v1296
      %s1298 = scalar_lea.vmem %s821, 8
      %v1299 = vld [vmem:[%s1298] sm:$0x3]
      %v1302 = vunpack.c.l.s4 1983009808
      %v1303 = vunpack.c.0.s8 %v1302
      %v1304 = vlaneseq
      %v1305 = vshrl.u32 %v1304, 7
      %v1306 = vsub.s32 %v1303, %v1305
      %v1307 = vrot.slane %v1237, %v1306
      %v1308 = vcombine.high %v1307, %v1307
      %v1311 = vsel %vm876, %v1307, 0.0
      %v1312 = vsel %vm876, %v1308, 0.0
      %v1313 = vadd.f32 %v1311, %v1312
      %1314 = vadd.xlane.f32.xlu0 %v1313
      %v1315 = vpop.xlane.xlu0 %1314
      %v1316 = vadd.f32 %v1299, %v1315
      %1317 = vst.msk [vmem:[%s1298] sm:$0x3] %vm883, %v1316
      %v1318 = vld [vmem:[%s774] sm:$0xf]
      %v1319 = vsub.f32 0.0, %v1318
      %v1320 = vmul.f32 %v1319, 1.442695
      %v1321 = vpow.pop %v1320
      %v1322 = vadd.f32 %v1321, 1.0
      %v1323 = vrcp.pop %v1322
      %v1324 = vmul.f32 1.0, %v1323
      %v1325 = vlog2.pop %v1322
      %v1326 = vmul.f32 %v1325, 0.6931472
      %v1327 = vsub.f32 0.0, %v1326
      %v1328 = vmax.f32 %v1327, -100.0
      %v1329 = vsub.f32 1.0, %v1324
      %v1330 = vlog2.pop %v1329
      %v1331 = vmul.f32 %v1330, 0.6931472
      %v1332 = vmax.f32 %v1331, -100.0
      %v1333 = vmul.f32 %v862, %v1328
      %v1334 = vmul.f32 %v863, %v1332
      %v1335 = vadd.f32 %v1333, %v1334
      %v1336 = vmul.f32 %v1324, %v862
      %s1337 = scalar_lea.vmem %s811, 5
      %v1338 = vld [vmem:[%s1337] sm:$0x1]
      %v1341 = vunpack.c.l.s4 1983009808
      %v1342 = vunpack.c.0.s8 %v1341
      %v1343 = vlaneseq
      %v1344 = vshrl.u32 %v1343, 7
      %v1345 = vsub.s32 %v1342, %v1344
      %v1346 = vrot.slane %v1335, %v1345
      %v1347 = vcombine.high %v1346, %v1346
      %v1350 = vsel %vm876, %v1346, 0.0
      %v1351 = vsel %vm876, %v1347, 0.0
      %v1352 = vadd.f32 %v1350, %v1351
      %1353 = vadd.xlane.f32.xlu0 %v1352
      %v1354 = vpop.xlane.xlu0 %1353
      %v1355 = vrot.slane %v1354, 4
      %v1356 = vadd.f32 %v1354, %v1355
      %v1357 = vrot.slane %v1356, 2
      %v1358 = vadd.f32 %v1356, %v1357
      %v1359 = vrot.slane %v1358, 1
      %v1360 = vadd.f32 %v1358, %v1359
      %s1361 = vtos %v1360
      %v1362 = vstv %s1361
      %v1363 = vadd.f32 %v1338, %v1362
      %1364 = vst.msk [vmem:[%s1337] sm:$0x1] %vm930, %v1363
      %s1365 = scalar_lea.vmem %s816, 10
      %v1366 = vld [vmem:[%s1365] sm:$0x3]
      %v1369 = vunpack.c.l.s4 1983009808
      %v1370 = vunpack.c.0.s8 %v1369
      %v1371 = vlaneseq
      %v1372 = vshrl.u32 %v1371, 7
      %v1373 = vsub.s32 %v1370, %v1372
      %v1374 = vrot.slane %v1336, %v1373
      %v1375 = vcombine.high %v1374, %v1374
      %v1378 = vsel %vm876, %v1374, 0.0
      %v1379 = vsel %vm876, %v1375, 0.0
      %v1380 = vadd.f32 %v1378, %v1379
      %1381 = vadd.xlane.f32.xlu0 %v1380
      %v1382 = vpop.xlane.xlu0 %1381
      %v1383 = vadd.f32 %v1366, %v1382
      %1384 = vst.msk [vmem:[%s1365] sm:$0x3] %vm883, %v1383
      %s1385 = scalar_lea.vmem %s821, 10
      %v1386 = vld [vmem:[%s1385] sm:$0x3]
      %v1389 = vunpack.c.l.s4 1983009808
      %v1390 = vunpack.c.0.s8 %v1389
      %v1391 = vlaneseq
      %v1392 = vshrl.u32 %v1391, 7
      %v1393 = vsub.s32 %v1390, %v1392
      %v1394 = vrot.slane %v1324, %v1393
      %v1395 = vcombine.high %v1394, %v1394
      %v1398 = vsel %vm876, %v1394, 0.0
      %v1399 = vsel %vm876, %v1395, 0.0
      %v1400 = vadd.f32 %v1398, %v1399
      %1401 = vadd.xlane.f32.xlu0 %v1400
      %v1402 = vpop.xlane.xlu0 %1401
      %v1403 = vadd.f32 %v1386, %v1402
      %1404 = vst.msk [vmem:[%s1385] sm:$0x3] %vm883, %v1403
      %v1405 = vld [vmem:[%s784] sm:$0xf]
      %v1406 = vsub.f32 0.0, %v1405
      %v1407 = vmul.f32 %v1406, 1.442695
      %v1408 = vpow.pop %v1407
      %v1409 = vadd.f32 %v1408, 1.0
      %v1410 = vrcp.pop %v1409
      %v1411 = vmul.f32 1.0, %v1410
      %v1412 = vlog2.pop %v1409
      %v1413 = vmul.f32 %v1412, 0.6931472
      %v1414 = vsub.f32 0.0, %v1413
      %v1415 = vmax.f32 %v1414, -100.0
      %v1416 = vsub.f32 1.0, %v1411
      %v1417 = vlog2.pop %v1416
      %v1418 = vmul.f32 %v1417, 0.6931472
      %v1419 = vmax.f32 %v1418, -100.0
      %v1420 = vmul.f32 %v862, %v1415
      %v1421 = vmul.f32 %v863, %v1419
      %v1422 = vadd.f32 %v1420, %v1421
      %v1423 = vmul.f32 %v1411, %v862
      %s1424 = scalar_lea.vmem %s811, 6
      %v1425 = vld [vmem:[%s1424] sm:$0x1]
      %v1428 = vunpack.c.l.s4 1983009808
      %v1429 = vunpack.c.0.s8 %v1428
      %v1430 = vlaneseq
      %v1431 = vshrl.u32 %v1430, 7
      %v1432 = vsub.s32 %v1429, %v1431
      %v1433 = vrot.slane %v1422, %v1432
      %v1434 = vcombine.high %v1433, %v1433
      %v1437 = vsel %vm876, %v1433, 0.0
      %v1438 = vsel %vm876, %v1434, 0.0
      %v1439 = vadd.f32 %v1437, %v1438
      %1440 = vadd.xlane.f32.xlu0 %v1439
      %v1441 = vpop.xlane.xlu0 %1440
      %v1442 = vrot.slane %v1441, 4
      %v1443 = vadd.f32 %v1441, %v1442
      %v1444 = vrot.slane %v1443, 2
      %v1445 = vadd.f32 %v1443, %v1444
      %v1446 = vrot.slane %v1445, 1
      %v1447 = vadd.f32 %v1445, %v1446
      %s1448 = vtos %v1447
      %v1449 = vstv %s1448
      %v1450 = vadd.f32 %v1425, %v1449
      %1451 = vst.msk [vmem:[%s1424] sm:$0x1] %vm930, %v1450
      %s1452 = scalar_lea.vmem %s816, 12
      %v1453 = vld [vmem:[%s1452] sm:$0x3]
      %v1456 = vunpack.c.l.s4 1983009808
      %v1457 = vunpack.c.0.s8 %v1456
      %v1458 = vlaneseq
      %v1459 = vshrl.u32 %v1458, 7
      %v1460 = vsub.s32 %v1457, %v1459
      %v1461 = vrot.slane %v1423, %v1460
      %v1462 = vcombine.high %v1461, %v1461
      %v1465 = vsel %vm876, %v1461, 0.0
      %v1466 = vsel %vm876, %v1462, 0.0
      %v1467 = vadd.f32 %v1465, %v1466
      %1468 = vadd.xlane.f32.xlu0 %v1467
      %v1469 = vpop.xlane.xlu0 %1468
      %v1470 = vadd.f32 %v1453, %v1469
      %1471 = vst.msk [vmem:[%s1452] sm:$0x3] %vm883, %v1470
      %s1472 = scalar_lea.vmem %s821, 12
      %v1473 = vld [vmem:[%s1472] sm:$0x3]
      %v1476 = vunpack.c.l.s4 1983009808
      %v1477 = vunpack.c.0.s8 %v1476
      %v1478 = vlaneseq
      %v1479 = vshrl.u32 %v1478, 7
      %v1480 = vsub.s32 %v1477, %v1479
      %v1481 = vrot.slane %v1411, %v1480
      %v1482 = vcombine.high %v1481, %v1481
      %v1485 = vsel %vm876, %v1481, 0.0
      %v1486 = vsel %vm876, %v1482, 0.0
      %v1487 = vadd.f32 %v1485, %v1486
      %1488 = vadd.xlane.f32.xlu0 %v1487
      %v1489 = vpop.xlane.xlu0 %1488
      %v1490 = vadd.f32 %v1473, %v1489
      %1491 = vst.msk [vmem:[%s1472] sm:$0x3] %vm883, %v1490
      %v1492 = vld [vmem:[%s794] sm:$0xf]
      %v1493 = vsub.f32 0.0, %v1492
      %v1494 = vmul.f32 %v1493, 1.442695
      %v1495 = vpow.pop %v1494
      %v1496 = vadd.f32 %v1495, 1.0
      %v1497 = vrcp.pop %v1496
      %v1498 = vmul.f32 1.0, %v1497
      %v1499 = vlog2.pop %v1496
      %v1500 = vmul.f32 %v1499, 0.6931472
      %v1501 = vsub.f32 0.0, %v1500
      %v1502 = vmax.f32 %v1501, -100.0
      %v1503 = vsub.f32 1.0, %v1498
      %v1504 = vlog2.pop %v1503
      %v1505 = vmul.f32 %v1504, 0.6931472
      %v1506 = vmax.f32 %v1505, -100.0
      %v1507 = vmul.f32 %v862, %v1502
      %v1508 = vmul.f32 %v863, %v1506
      %v1509 = vadd.f32 %v1507, %v1508
      %v1510 = vmul.f32 %v1498, %v862
      %s1511 = scalar_lea.vmem %s811, 7
      %v1512 = vld [vmem:[%s1511] sm:$0x1]
      %v1515 = vunpack.c.l.s4 1983009808
      %v1516 = vunpack.c.0.s8 %v1515
      %v1517 = vlaneseq
      %v1518 = vshrl.u32 %v1517, 7
      %v1519 = vsub.s32 %v1516, %v1518
      %v1520 = vrot.slane %v1509, %v1519
      %v1521 = vcombine.high %v1520, %v1520
      %v1524 = vsel %vm876, %v1520, 0.0
      %v1525 = vsel %vm876, %v1521, 0.0
      %v1526 = vadd.f32 %v1524, %v1525
      %1527 = vadd.xlane.f32.xlu0 %v1526
      %v1528 = vpop.xlane.xlu0 %1527
      %v1529 = vrot.slane %v1528, 4
      %v1530 = vadd.f32 %v1528, %v1529
      %v1531 = vrot.slane %v1530, 2
      %v1532 = vadd.f32 %v1530, %v1531
      %v1533 = vrot.slane %v1532, 1
      %v1534 = vadd.f32 %v1532, %v1533
      %s1535 = vtos %v1534
      %v1536 = vstv %s1535
      %v1537 = vadd.f32 %v1512, %v1536
      %1538 = vst.msk [vmem:[%s1511] sm:$0x1] %vm930, %v1537
      %s1539 = scalar_lea.vmem %s816, 14
      %v1540 = vld [vmem:[%s1539] sm:$0x3]
      %v1543 = vunpack.c.l.s4 1983009808
      %v1544 = vunpack.c.0.s8 %v1543
      %v1545 = vlaneseq
      %v1546 = vshrl.u32 %v1545, 7
      %v1547 = vsub.s32 %v1544, %v1546
      %v1548 = vrot.slane %v1510, %v1547
      %v1549 = vcombine.high %v1548, %v1548
      %v1552 = vsel %vm876, %v1548, 0.0
      %v1553 = vsel %vm876, %v1549, 0.0
      %v1554 = vadd.f32 %v1552, %v1553
      %1555 = vadd.xlane.f32.xlu0 %v1554
      %v1556 = vpop.xlane.xlu0 %1555
      %v1557 = vadd.f32 %v1540, %v1556
      %1558 = vst.msk [vmem:[%s1539] sm:$0x3] %vm883, %v1557
      %s1559 = scalar_lea.vmem %s821, 14
      %v1560 = vld [vmem:[%s1559] sm:$0x3]
      %v1563 = vunpack.c.l.s4 1983009808
      %v1564 = vunpack.c.0.s8 %v1563
      %v1565 = vlaneseq
      %v1566 = vshrl.u32 %v1565, 7
      %v1567 = vsub.s32 %v1564, %v1566
      %v1568 = vrot.slane %v1498, %v1567
      %v1569 = vcombine.high %v1568, %v1568
      %v1572 = vsel %vm876, %v1568, 0.0
      %v1573 = vsel %vm876, %v1569, 0.0
      %v1574 = vadd.f32 %v1572, %v1573
      %1575 = vadd.xlane.f32.xlu0 %v1574
      %v1576 = vpop.xlane.xlu0 %1575
      %v1577 = vadd.f32 %v1560, %v1576
      %1578 = vst.msk [vmem:[%s1559] sm:$0x3] %vm883, %v1577
      %v1579 = vld [vmem:[%s804] sm:$0xf]
      %v1580 = vsub.f32 0.0, %v1579
      %v1581 = vmul.f32 %v1580, 1.442695
      %v1582 = vpow.pop %v1581
      %v1583 = vadd.f32 %v1582, 1.0
      %v1584 = vrcp.pop %v1583
      %v1585 = vmul.f32 1.0, %v1584
      %v1586 = vlog2.pop %v1583
      %v1587 = vmul.f32 %v1586, 0.6931472
      %v1588 = vsub.f32 0.0, %v1587
      %v1589 = vmax.f32 %v1588, -100.0
      %v1590 = vsub.f32 1.0, %v1585
      %v1591 = vlog2.pop %v1590
      %v1592 = vmul.f32 %v1591, 0.6931472
      %v1593 = vmax.f32 %v1592, -100.0
      %v1594 = vmul.f32 %v862, %v1589
      %v1595 = vmul.f32 %v863, %v1593
      %v1596 = vadd.f32 %v1594, %v1595
      %v1597 = vmul.f32 %v1585, %v862
      %s1598 = scalar_lea.vmem %s811, 8
      %v1599 = vld [vmem:[%s1598] sm:$0x1]
      %v1602 = vunpack.c.l.s4 1983009808
      %v1603 = vunpack.c.0.s8 %v1602
      %v1604 = vlaneseq
      %v1605 = vshrl.u32 %v1604, 7
      %v1606 = vsub.s32 %v1603, %v1605
      %v1607 = vrot.slane %v1596, %v1606
      %v1608 = vcombine.high %v1607, %v1607
      %v1611 = vsel %vm876, %v1607, 0.0
      %v1612 = vsel %vm876, %v1608, 0.0
      %v1613 = vadd.f32 %v1611, %v1612
      %1614 = vadd.xlane.f32.xlu0 %v1613
      %v1615 = vpop.xlane.xlu0 %1614
      %v1616 = vrot.slane %v1615, 4
      %v1617 = vadd.f32 %v1615, %v1616
      %v1618 = vrot.slane %v1617, 2
      %v1619 = vadd.f32 %v1617, %v1618
      %v1620 = vrot.slane %v1619, 1
      %v1621 = vadd.f32 %v1619, %v1620
      %s1622 = vtos %v1621
      %v1623 = vstv %s1622
      %v1624 = vadd.f32 %v1599, %v1623
      %1625 = vst.msk [vmem:[%s1598] sm:$0x1] %vm930, %v1624
      %s1626 = scalar_lea.vmem %s816, 16
      %v1627 = vld [vmem:[%s1626] sm:$0x3]
      %v1630 = vunpack.c.l.s4 1983009808
      %v1631 = vunpack.c.0.s8 %v1630
      %v1632 = vlaneseq
      %v1633 = vshrl.u32 %v1632, 7
      %v1634 = vsub.s32 %v1631, %v1633
      %v1635 = vrot.slane %v1597, %v1634
      %v1636 = vcombine.high %v1635, %v1635
      %v1639 = vsel %vm876, %v1635, 0.0
      %v1640 = vsel %vm876, %v1636, 0.0
      %v1641 = vadd.f32 %v1639, %v1640
      %1642 = vadd.xlane.f32.xlu0 %v1641
      %v1643 = vpop.xlane.xlu0 %1642
      %v1644 = vadd.f32 %v1627, %v1643
      %1645 = vst.msk [vmem:[%s1626] sm:$0x3] %vm883, %v1644
      %s1646 = scalar_lea.vmem %s821, 16
      %v1647 = vld [vmem:[%s1646] sm:$0x3]
      %v1650 = vunpack.c.l.s4 1983009808
      %v1651 = vunpack.c.0.s8 %v1650
      %v1652 = vlaneseq
      %v1653 = vshrl.u32 %v1652, 7
      %v1654 = vsub.s32 %v1651, %v1653
      %v1655 = vrot.slane %v1585, %v1654
      %v1656 = vcombine.high %v1655, %v1655
      %v1659 = vsel %vm876, %v1655, 0.0
      %v1660 = vsel %vm876, %v1656, 0.0
      %v1661 = vadd.f32 %v1659, %v1660
      %1662 = vadd.xlane.f32.xlu0 %v1661
      %v1663 = vpop.xlane.xlu0 %1662
      %v1664 = vadd.f32 %v1647, %v1663
      %1665 = vst.msk [vmem:[%s1646] sm:$0x3] %vm883, %v1664
      %p1666 = scmp.lt.s32.totalorder %s29, 1
      %s1667 = scalar_select %p1666, %s29, 1
      %s1668 = smul.addr %s1667, 9
      %s1669 = scalar_lea.vmem %s10, %s1668
      %p1670 = scmp.lt.s32.totalorder %s29, 1
      %s1671 = scalar_select %p1670, %s29, 1
      %s1672 = smul.addr %s1671, 9
      %s1673 = smul.addr %s1672, 2
      %s1674 = scalar_lea.vmem %s11, %s1673
      %p1675 = scmp.lt.s32.totalorder %s29, 1
      %s1676 = scalar_select %p1675, %s29, 1
      %s1677 = smul.addr %s1676, 9
      %s1678 = smul.addr %s1677, 2
      %s1679 = scalar_lea.vmem %s12, %s1678
      %p1680 = scmp.lt.s32.totalorder %s29, 1
      %s1681 = scalar_select %p1680, %s29, 1
      %s1682 = smul.addr %s1681, 2
      %s1683 = scalar_lea.vmem %s13, %s1682
      // Predicated region
      $region65: #{_lambda_.1} parent=59 // pred_check
        %p1684 = pneg %p355
      $region66: #{_lambda_.1} parent=59 // pred_check_branch
        %1686 = sbr.rel (%p1684) target = $region68
      $region67: #{_lambda_.1} parent=59 // pred_region
        _
      $region68: #{_lambda_.1} parent=59 // pred_fallthru
        _
      // Predicated region
      $region69: #{_lambda_.1} parent=59 // pred_check
        %p1687 = pneg %p381
      $region70: #{_lambda_.1} parent=59 // pred_check_branch
        %1689 = sbr.rel (%p1687) target = $region72
      $region71: #{_lambda_.1} parent=59 // pred_region
        _
      $region72: #{_lambda_.1} parent=59 // pred_fallthru
        _
      // Predicated region
      $region73: #{_lambda_.1} parent=59 // pred_check
        %p1690 = pneg %p407
      $region74: #{_lambda_.1} parent=59 // pred_check_branch
        %1692 = sbr.rel (%p1690) target = $region76
      $region75: #{_lambda_.1} parent=59 // pred_region
        _
      $region76: #{_lambda_.1} parent=59 // pred_fallthru
        _
      // Predicated region
      $region77: #{_lambda_.1} parent=59 // pred_check
        %p1693 = pneg %p433
      $region78: #{_lambda_.1} parent=59 // pred_check_branch
        %1695 = sbr.rel (%p1693) target = $region80
      $region79: #{_lambda_.1} parent=59 // pred_region
        _
      $region80: #{_lambda_.1} parent=59 // pred_fallthru
        _
    $region60: #{_lambda_.1} parent=5 // pred_fallthru
      _
    %p1696 = scmp.le.s32.totalorder 2, %s20
    // Predicated region
    $region81: #{_lambda_.1} parent=5 // pred_check
      %p1697 = pneg %p1696
    $region82: #{_lambda_.1} parent=5 // pred_check_branch
      %1699 = sbr.rel (%p1697) target = $region84
    $region83: #{_lambda_.1} parent=5 // pred_region
      %s1700 = ssub.s32 %s20, 2
      // Predicated region
      $region85: #{_lambda_.1} parent=83 // pred_check
        %p1701 = pneg %p361
      $region86: #{_lambda_.1} parent=83 // pred_check_branch
        %1703 = sbr.rel (%p1701) target = $region88
      $region87: #{_lambda_.1} parent=83 // pred_region
        %p1704 = scmp.lt.s32.totalorder %s31, 1
        %s1705 = scalar_select %p1704, %s31, 1
        %s1706 = smul.addr %s1705, 9
        %s1707 = scalar_lea.vmem %s10, %s1706
      $region88: #{_lambda_.1} parent=83 // pred_fallthru
        _
      // Predicated region
      $region89: #{_lambda_.1} parent=83 // pred_check
        %p1708 = pneg %p387
      $region90: #{_lambda_.1} parent=83 // pred_check_branch
        %1710 = sbr.rel (%p1708) target = $region92
      $region91: #{_lambda_.1} parent=83 // pred_region
        %p1711 = scmp.lt.s32.totalorder %s31, 1
        %s1712 = scalar_select %p1711, %s31, 1
        %s1713 = smul.addr %s1712, 9
        %s1714 = smul.addr %s1713, 2
        %s1715 = scalar_lea.vmem %s11, %s1714
      $region92: #{_lambda_.1} parent=83 // pred_fallthru
        _
      // Predicated region
      $region93: #{_lambda_.1} parent=83 // pred_check
        %p1716 = pneg %p413
      $region94: #{_lambda_.1} parent=83 // pred_check_branch
        %1718 = sbr.rel (%p1716) target = $region96
      $region95: #{_lambda_.1} parent=83 // pred_region
        %p1719 = scmp.lt.s32.totalorder %s31, 1
        %s1720 = scalar_select %p1719, %s31, 1
        %s1721 = smul.addr %s1720, 9
        %s1722 = smul.addr %s1721, 2
        %s1723 = scalar_lea.vmem %s12, %s1722
      $region96: #{_lambda_.1} parent=83 // pred_fallthru
        _
      // Predicated region
      $region97: #{_lambda_.1} parent=83 // pred_check
        %p1724 = pneg %p439
      $region98: #{_lambda_.1} parent=83 // pred_check_branch
        %1726 = sbr.rel (%p1724) target = $region100
      $region99: #{_lambda_.1} parent=83 // pred_region
        %p1727 = scmp.lt.s32.totalorder %s31, 1
        %s1728 = scalar_select %p1727, %s31, 1
        %s1729 = smul.addr %s1728, 2
        %s1730 = scalar_lea.vmem %s13, %s1729
      $region100: #{_lambda_.1} parent=83 // pred_fallthru
        _
    $region84: #{_lambda_.1} parent=5 // pred_fallthru
      _
  $region6: #{_lambda_.1} parent=0 // loop_footer
    %s24 = sadd.s32 1, %s20
  $region7: #{_lambda_.1} parent=0 // loop_footer_branch
    %19 = sbr.rel target = $region3
  $region8: #{_lambda_.1} parent=0 // loop_exit
    _

</llo_original>
